<compile_context>
chip_gen: v5e
topology: v5e:2x2
jax: 0.10.0
libtpu: 0.0.40
codegen_flags: <defaults>
</compile_context>

<pallas_src>
import functools

import jax
import jax.numpy as jnp
from jax import lax
from jax.experimental import pallas as pl
from jax.experimental.pallas import tpu as pltpu


def _round_up(x: int, m: int) -> int:
    return (x + m - 1) // m * m


# ---------------------------------------------------------------------------
# sinc_int as a (k*k, k*k) linear operator on the flattened spatial dims.
# The reference sinc_int's transform does not depend on the (N, C) axes
# (A is a single 2x2 matrix), so rotating a stack of filters is a matmul
# with this matrix.  Tiny setup glue (k^2 x k^2), done in plain JAX.
# ---------------------------------------------------------------------------
def sinc_interp_matrix(k: int, A: jnp.ndarray) -> jnp.ndarray:
    cx = jnp.arange(k) - k // 2
    cy = jnp.arange(k) - k // 2
    gx, gy = jnp.meshgrid(cx, cy, indexing="ij")                       # (k, k)
    centered = jnp.stack([gx.reshape(-1), gy.reshape(-1)], 0)          # (2, k*k)
    centered = centered.astype(jnp.float32)
    transform = A @ centered                                           # (2, k*k)
    # Asymmetric offsets (k//2 - 1 vs k//2) intentionally mirror the reference.
    tx = transform[0] + k // 2 - 1                                     # (k*k,)
    ty = transform[1] + k // 2                                         # (k*k,)
    old = jnp.arange(k, dtype=jnp.float32)
    tile_x = tx[None, :] - old[:, None]                                # (k, k*k)
    tile_y = ty[None, :] - old[:, None]                                # (k, k*k)
    sx = jnp.sinc(tile_x)   # sin(pi x)/(pi x), same as torch.special.sinc
    sy = jnp.sinc(tile_y)
    M = jnp.einsum("kl,ml->kml", sx, sy)                               # (k, k, k*k)
    return M.reshape(k * k, k * k)


def sinc_int_apply(w: jnp.ndarray, M: jnp.ndarray) -> jnp.ndarray:
    """w: (OC, IC, k, k) -> rotated (OC, IC, k, k) via the sinc interp matrix."""
    oc, ic, k, _ = w.shape
    flat = w.reshape(oc * ic, k * k)
    new = flat @ M
    return new.reshape(oc, ic, k, k)


def build_group_filters(weight: jnp.ndarray, kernel_size: int, theta: float):
    """Group of rotated filters, same recurrence as the reference:
    gen_b[i] = sinc_int(gen_b[i-1], A).  Returns (G*OC, IC, k, k) f32."""
    group_size = int(360 // theta)
    # NOTE: matches the PyTorch module exactly: theta is fed to cos/sin in
    # *radians* (torch.cos(torch.Tensor([90.])) == cos(90 rad)).
    th = jnp.float32(theta)
    A = jnp.array([[jnp.cos(th), -jnp.sin(th)],
                   [jnp.sin(th),  jnp.cos(th)]], dtype=jnp.float32)
    M = sinc_interp_matrix(kernel_size, A)
    filters = [weight.astype(jnp.float32)]
    for _ in range(1, group_size):
        filters.append(sinc_int_apply(filters[-1], M))
    gen_b = jnp.stack(filters, axis=0)                     # (G, OC, IC, k, k)
    g, oc, ic, k, _ = gen_b.shape
    return gen_b.reshape(g * oc, ic, k, k)                 # (G*OC, IC, k, k)


# ---------------------------------------------------------------------------
# Pallas conv2d kernel: in-kernel padding + aligned bf16 im2col scratch +
# one fused MXU matmul, lane-dense NCHW output.
# ---------------------------------------------------------------------------
def _conv_kernel(x_ref, w_ref, o_ref, xpad_ref, xcol_ref, *,
                 kh, kw, stride, padding, ho, wo, kkc, npix):
    # x_ref:    (Bt, Cin, H, W)           native dtype (f32) NCHW block
    # w_ref:    (Cout_pad, K_pad)         bf16 filter bank (zero-padded cols)
    # o_ref:    (Bt, Cout_pad, npix_pad)  f32 lane-dense NCHW output
    # xpad_ref: (Cin, Hp, Wp)             bf16 scratch (padded image)
    # xcol_ref: (K_pad, npix_pad)         bf16 scratch (aligned im2col)
    bt, cin, h, w = x_ref.shape
    _, hp, wp = xpad_ref.shape
    k_pad, npix_pad = xcol_ref.shape

    # ---- once per grid step (NOT per image, NOT per Cout tile) ------------
    # Padded K rows must be zero: the matching weight columns are zero, but
    # stale VMEM could hold inf/NaN and 0*inf = NaN would contaminate output.
    if kkc < k_pad:
        xcol_ref[kkc:, :] = jnp.zeros((k_pad - kkc, npix_pad), xcol_ref.dtype)
    # Zero only the 4 halo strips; the interior is fully overwritten below.
    if padding > 0:
        xpad_ref[:, :padding, :] = jnp.zeros((cin, padding, wp), xpad_ref.dtype)
        xpad_ref[:, padding + h:, :] = jnp.zeros((cin, padding, wp), xpad_ref.dtype)
        xpad_ref[:, padding:padding + h, :padding] = (
            jnp.zeros((cin, h, padding), xpad_ref.dtype))
        xpad_ref[:, padding:padding + h, padding + w:] = (
            jnp.zeros((cin, h, padding), xpad_ref.dtype))

    wv = w_ref[...]                                     # (Cout_pad, K_pad) bf16

    for bidx in range(bt):                              # static unroll, Bt small
        # Stage the image into the bf16 padded scratch: the f32->bf16 cast
        # happens here (inside the kernel), not as a wrapper HBM pass.
        if padding > 0:
            xpad_ref[:, padding:padding + h, padding:padding + w] = (
                x_ref[bidx].astype(xpad_ref.dtype))
        else:
            xpad_ref[...] = x_ref[bidx].astype(xpad_ref.dtype)

        # im2col into the aligned scratch; rows ordered (i, j, ci) to match
        # the wrapper's filter layout.
        if stride > 1:
            # TODO(synk): repack strided taps into a contiguous buffer once
            # instead of strided value slices (path not exercised by __main__).
            xp = xpad_ref[...]
        for i in range(kh):
            for j in range(kw):
                r = (i * kw + j) * cin
                if stride == 1:
                    xs = xpad_ref[:, i:i + ho, j:j + wo]
                else:
                    xs = lax.slice(
                        xp, (0, i, j),
                        (cin, i + (ho - 1) * stride + 1,
                         j + (wo - 1) * stride + 1),
                        (1, stride, stride))
                xcol_ref[r:r + cin, :npix] = xs.reshape(cin, npix)

        # Single fused contraction on the MXU: bf16 operands, f32 accumulate.
        acc = jnp.dot(wv, xcol_ref[...],
                      preferred_element_type=jnp.float32)   # (Cout_pad, npix_pad)
        o_ref[bidx] = acc.astype(o_ref.dtype)


def _vmem_ceiling_bytes() -> int:
    cap = 64 << 20  # conservative default: v7x per-TensorCore physical VMEM
    try:
        info = pltpu.get_tpu_info()
        cap = int(getattr(info, "vmem_capacity_bytes", cap))
    except Exception:
        pass
    return min(int(cap * 3 // 4), 112 << 20)


def pallas_conv2d_nchw(x_nchw, w_flat, *, kh, kw, stride, padding,
                       out_dtype=jnp.float32):
    """x_nchw: (B, Cin, H, W); w_flat: (Cout, kh*kw*Cin) ordered (i, j, ci).
    Returns (B, Cout, Ho, Wo) in out_dtype (matches F.conv2d without bias)."""
    b, cin, h, w = x_nchw.shape
    cout, kkc = w_flat.shape
    assert kkc == kh * kw * cin
    hp, wp = h + 2 * padding, w + 2 * padding
    ho = (hp - kh) // stride + 1
    wo = (wp - kw) // stride + 1
    npix = ho * wo

    cout_pad = _round_up(cout, 8)        # sublane-aligned M
    k_pad = _round_up(kkc, 16)           # bf16 sublane packing for im2col rows
    npix_pad = _round_up(npix, 128)      # lane-dense output / matmul N

    # Weight bank: bf16, zero-padded to (cout_pad, k_pad).  Tiny tensor.
    w_p = jnp.pad(w_flat.astype(jnp.bfloat16),
                  ((0, cout_pad - cout), (0, k_pad - kkc)))

    x_bytes = jnp.dtype(x_nchw.dtype).itemsize
    o_bytes = jnp.dtype(out_dtype).itemsize

    def _vmem_bytes(bt):
        return (2 * bt * cin * h * w * x_bytes            # input blocks (2 bufs)
                + 2 * cout_pad * k_pad * 2                # weight blocks
                + 2 * bt * cout_pad * npix_pad * o_bytes  # output blocks
                + cin * hp * wp * 2                       # xpad scratch (bf16)
                + k_pad * npix_pad * 2                    # im2col scratch (bf16)
                + 2 * cout_pad * npix_pad * 4)            # matmul acc working set

    budget = _vmem_ceiling_bytes()

    # Batch blocking: amortize per-grid-step overhead and weight residency,
    # but keep >= 2 grid steps when B > 1 so both v7x TensorCores get work
    # (batch is the megacore axis; Cout is never split -> im2col built once).
    bt = 1
    for cand in range(2, b + 1):
        if b % cand:
            continue
        if b // cand < 2:
            break
        if _vmem_bytes(cand) > budget:
            break
        bt = cand

    vmem_limit = int(min(budget, max(2 * _vmem_bytes(bt), 32 << 20)))

    kernel = functools.partial(_conv_kernel, kh=kh, kw=kw, stride=stride,
                               padding=padding, ho=ho, wo=wo, kkc=kkc,
                               npix=npix)

    # TODO(synk): for very large H*W add an Ho-tile grid axis (kh-1 row halo)
    # so blocks also fit v7x's 64 MiB VMEM; unnecessary at these image sizes.
    out = pl.pallas_call(
        kernel,
        out_shape=jax.ShapeDtypeStruct((b, cout_pad, npix_pad), out_dtype),
        grid_spec=pltpu.PrefetchScalarGridSpec(
            num_scalar_prefetch=0,
            grid=(b // bt,),
            in_specs=[
                pl.BlockSpec((bt, cin, h, w), lambda bi: (bi, 0, 0, 0)),
                pl.BlockSpec((cout_pad, k_pad), lambda bi: (0, 0)),
            ],
            out_specs=pl.BlockSpec((bt, cout_pad, npix_pad),
                                   lambda bi: (bi, 0, 0)),
            scratch_shapes=[
                pltpu.VMEM((cin, hp, wp), jnp.bfloat16),
                pltpu.VMEM((k_pad, npix_pad), jnp.bfloat16),
            ],
        ),
        compiler_params=pltpu.CompilerParams(
            dimension_semantics=("parallel",),
            vmem_limit_bytes=vmem_limit),
    )(x_nchw, w_p)

    # Drop alignment padding and restore (B, Cout, Ho, Wo).
    if cout_pad != cout or npix_pad != npix:
        out = out[:, :cout, :npix]
    return out.reshape(b, cout, ho, wo)


# ---------------------------------------------------------------------------
# GCNN_layer forward
# ---------------------------------------------------------------------------
def gcnn_layer_forward(x_nchw, weight, bias=None, *, kernel_size, stride=1,
                       padding=0, theta=90.0):
    """x_nchw: (B, Cin, H, W); weight: (OC, Cin, k, k).
    `bias` mirrors the module's parameter but is NOT applied: the reference
    forward calls F.conv2d without bias."""
    del bias
    gen_b = build_group_filters(weight, kernel_size, theta)   # (G*OC, IC, k, k)
    k = kernel_size
    ic = gen_b.shape[1]
    # Flatten filters to (G*OC, k*k*IC) with (i, j, ci) ordering to match the
    # kernel's im2col rows.  (Tiny tensor; transpose cost is negligible.)
    w_flat = jnp.transpose(gen_b, (0, 2, 3, 1)).reshape(gen_b.shape[0], k * k * ic)
    # Conv runs in NCHW and returns NCHW directly: no activation transposes.
    return pallas_conv2d_nchw(x_nchw, w_flat, kh=k, kw=k,
                              stride=stride, padding=padding)


if __name__ == "__main__":
    # Small deterministic config: B=2, Cin=4, OC=4, k=3, H=W=16, theta=90 -> G=4
    B, Cin, H, W = 2, 4, 16, 16
    OC, K = 4, 3
    theta = 90.0
    G = int(360 // theta)
    stride, padding = 1, 0

    key = jax.random.PRNGKey(0)
    kx, kw_, kb = jax.random.split(key, 3)

    x = jax.random.normal(kx, (B, Cin, H, W), dtype=jnp.float32)

    # kaiming_uniform_ (nonlinearity='relu'): bound = sqrt(6 / fan_in)
    fan_in = Cin * K * K
    bound = (6.0 / fan_in) ** 0.5
    weight = jax.random.uniform(kw_, (OC, Cin, K, K), jnp.float32, -bound, bound)
    # The module's bias parameter exists but the reference forward never uses it.
    bias = jax.random.uniform(kb, (G * OC,), jnp.float32, -0.1, 0.1)

    out = gcnn_layer_forward(x, weight, bias, kernel_size=K,
                             stride=stride, padding=padding, theta=theta)
    out = jax.block_until_ready(out)
    assert out.shape == (B, G * OC, H - K + 1, W - K + 1), out.shape

    # Cross-check against the XLA conv (bf16 MXU operands -> loose tolerance).
    gen_b = build_group_filters(weight, K, theta)
    ref = lax.conv_general_dilated(
        x, gen_b, window_strides=(stride, stride),
        padding=[(padding, padding), (padding, padding)],
        dimension_numbers=("NCHW", "OIHW", "NCHW"))
    rel = jnp.linalg.norm((out - ref).ravel()) / (jnp.linalg.norm(ref.ravel()) + 1e-12)
    assert float(rel) < 5e-2, float(rel)

    print("KERNEL_OK")
</pallas_src>

<mosaic_0001>
module attributes {stable_mosaic.version = 11 : i64} {
  func.func @_conv_kernel(%arg0: i32, %arg1: memref<1x4x16x16xf32, #tpu.memory_space<vmem>>, %arg2: memref<16x48xbf16, #tpu.memory_space<vmem>>, %arg3: memref<1x16x256xf32, #tpu.memory_space<vmem>>, %arg4: memref<4x16x16xbf16, #tpu.memory_space<vmem>>, %arg5: memref<48x256xbf16, #tpu.memory_space<vmem>>) attributes {dimension_semantics = [#tpu.dimension_semantics<parallel>], iteration_bounds = array<i64: 2>, scalar_prefetch = 0 : i64, scratch_operands = 2 : i64, tpu.core_type = #tpu.core_type<tc>, window_params = [{transform_indices = @transform_0, window_bounds = array<i64: 1, 4, 16, 16>}, {pipeline_mode = #tpu.pipeline_mode<synchronous>, transform_indices = @transform_1, window_bounds = array<i64: 16, 48>}, {transform_indices = @transform_2, window_bounds = array<i64: 1, 16, 256>}]} {
    %cst = arith.constant 0.000000e+00 : bf16
    %0 = vector.broadcast %cst : bf16 to vector<12x256xbf16>
    %c36 = arith.constant 36 : index
    %c0 = arith.constant 0 : index
    %1 = vector.load %arg5[%c36, %c0] : memref<48x256xbf16, #tpu.memory_space<vmem>>, vector<12x256xbf16>
    tpu.vector_store %arg5[%c36, %c0], %0 {strides = array<i32>} : memref<48x256xbf16, #tpu.memory_space<vmem>>, vector<12x256xbf16>,
    %c0_0 = arith.constant 0 : index
    %c0_1 = arith.constant 0 : index
    %2 = vector.load %arg2[%c0_0, %c0_1] : memref<16x48xbf16, #tpu.memory_space<vmem>>, vector<16x48xbf16>
    %c0_2 = arith.constant 0 : index
    %c0_3 = arith.constant 0 : index
    %c0_4 = arith.constant 0 : index
    %c0_5 = arith.constant 0 : index
    %3 = vector.load %arg1[%c0_2, %c0_3, %c0_4, %c0_5] : memref<1x4x16x16xf32, #tpu.memory_space<vmem>>, vector<1x4x16x16xf32>
    %4 = vector.shape_cast %3 : vector<1x4x16x16xf32> to vector<4x16x16xf32>
    %5 = arith.truncf %4 : vector<4x16x16xf32> to vector<4x16x16xbf16>
    %c0_6 = arith.constant 0 : index
    %c0_7 = arith.constant 0 : index
    %c0_8 = arith.constant 0 : index
    %6 = vector.load %arg4[%c0_6, %c0_7, %c0_8] : memref<4x16x16xbf16, #tpu.memory_space<vmem>>, vector<4x16x16xbf16>
    tpu.vector_store %arg4[%c0_6, %c0_7, %c0_8], %5 {strides = array<i32>} : memref<4x16x16xbf16, #tpu.memory_space<vmem>>, vector<4x16x16xbf16>,
    %c0_9 = arith.constant 0 : index
    %c0_10 = arith.constant 0 : index
    %c0_11 = arith.constant 0 : index
    %7 = vector.load %arg4[%c0_9, %c0_10, %c0_11] : memref<4x16x16xbf16, #tpu.memory_space<vmem>>, vector<4x14x14xbf16>
    %8 = vector.shape_cast %7 : vector<4x14x14xbf16> to vector<4x196xbf16>
    %c0_12 = arith.constant 0 : index
    %c0_13 = arith.constant 0 : index
    %9 = vector.load %arg5[%c0_12, %c0_13] : memref<48x256xbf16, #tpu.memory_space<vmem>>, vector<4x196xbf16>
    tpu.vector_store %arg5[%c0_12, %c0_13], %8 {strides = array<i32>} : memref<48x256xbf16, #tpu.memory_space<vmem>>, vector<4x196xbf16>,
    %c0_14 = arith.constant 0 : index
    %c0_15 = arith.constant 0 : index
    %c1 = arith.constant 1 : index
    %10 = vector.load %arg4[%c0_14, %c0_15, %c1] : memref<4x16x16xbf16, #tpu.memory_space<vmem>>, vector<4x14x14xbf16>
    %11 = vector.shape_cast %10 : vector<4x14x14xbf16> to vector<4x196xbf16>
    %c4 = arith.constant 4 : index
    %c0_16 = arith.constant 0 : index
    %12 = vector.load %arg5[%c4, %c0_16] : memref<48x256xbf16, #tpu.memory_space<vmem>>, vector<4x196xbf16>
    tpu.vector_store %arg5[%c4, %c0_16], %11 {strides = array<i32>} : memref<48x256xbf16, #tpu.memory_space<vmem>>, vector<4x196xbf16>,
    %c0_17 = arith.constant 0 : index
    %c0_18 = arith.constant 0 : index
    %c2 = arith.constant 2 : index
    %13 = vector.load %arg4[%c0_17, %c0_18, %c2] : memref<4x16x16xbf16, #tpu.memory_space<vmem>>, vector<4x14x14xbf16>
    %14 = vector.shape_cast %13 : vector<4x14x14xbf16> to vector<4x196xbf16>
    %c8 = arith.constant 8 : index
    %c0_19 = arith.constant 0 : index
    %15 = vector.load %arg5[%c8, %c0_19] : memref<48x256xbf16, #tpu.memory_space<vmem>>, vector<4x196xbf16>
    tpu.vector_store %arg5[%c8, %c0_19], %14 {strides = array<i32>} : memref<48x256xbf16, #tpu.memory_space<vmem>>, vector<4x196xbf16>,
    %c0_20 = arith.constant 0 : index
    %c1_21 = arith.constant 1 : index
    %c0_22 = arith.constant 0 : index
    %16 = vector.load %arg4[%c0_20, %c1_21, %c0_22] : memref<4x16x16xbf16, #tpu.memory_space<vmem>>, vector<4x14x14xbf16>
    %17 = vector.shape_cast %16 : vector<4x14x14xbf16> to vector<4x196xbf16>
    %c12 = arith.constant 12 : index
    %c0_23 = arith.constant 0 : index
    %18 = vector.load %arg5[%c12, %c0_23] : memref<48x256xbf16, #tpu.memory_space<vmem>>, vector<4x196xbf16>
    tpu.vector_store %arg5[%c12, %c0_23], %17 {strides = array<i32>} : memref<48x256xbf16, #tpu.memory_space<vmem>>, vector<4x196xbf16>,
    %c0_24 = arith.constant 0 : index
    %c1_25 = arith.constant 1 : index
    %c1_26 = arith.constant 1 : index
    %19 = vector.load %arg4[%c0_24, %c1_25, %c1_26] : memref<4x16x16xbf16, #tpu.memory_space<vmem>>, vector<4x14x14xbf16>
    %20 = vector.shape_cast %19 : vector<4x14x14xbf16> to vector<4x196xbf16>
    %c16 = arith.constant 16 : index
    %c0_27 = arith.constant 0 : index
    %21 = vector.load %arg5[%c16, %c0_27] : memref<48x256xbf16, #tpu.memory_space<vmem>>, vector<4x196xbf16>
    tpu.vector_store %arg5[%c16, %c0_27], %20 {strides = array<i32>} : memref<48x256xbf16, #tpu.memory_space<vmem>>, vector<4x196xbf16>,
    %c0_28 = arith.constant 0 : index
    %c1_29 = arith.constant 1 : index
    %c2_30 = arith.constant 2 : index
    %22 = vector.load %arg4[%c0_28, %c1_29, %c2_30] : memref<4x16x16xbf16, #tpu.memory_space<vmem>>, vector<4x14x14xbf16>
    %23 = vector.shape_cast %22 : vector<4x14x14xbf16> to vector<4x196xbf16>
    %c20 = arith.constant 20 : index
    %c0_31 = arith.constant 0 : index
    %24 = vector.load %arg5[%c20, %c0_31] : memref<48x256xbf16, #tpu.memory_space<vmem>>, vector<4x196xbf16>
    tpu.vector_store %arg5[%c20, %c0_31], %23 {strides = array<i32>} : memref<48x256xbf16, #tpu.memory_space<vmem>>, vector<4x196xbf16>,
    %c0_32 = arith.constant 0 : index
    %c2_33 = arith.constant 2 : index
    %c0_34 = arith.constant 0 : index
    %25 = vector.load %arg4[%c0_32, %c2_33, %c0_34] : memref<4x16x16xbf16, #tpu.memory_space<vmem>>, vector<4x14x14xbf16>
    %26 = vector.shape_cast %25 : vector<4x14x14xbf16> to vector<4x196xbf16>
    %c24 = arith.constant 24 : index
    %c0_35 = arith.constant 0 : index
    %27 = vector.load %arg5[%c24, %c0_35] : memref<48x256xbf16, #tpu.memory_space<vmem>>, vector<4x196xbf16>
    tpu.vector_store %arg5[%c24, %c0_35], %26 {strides = array<i32>} : memref<48x256xbf16, #tpu.memory_space<vmem>>, vector<4x196xbf16>,
    %c0_36 = arith.constant 0 : index
    %c2_37 = arith.constant 2 : index
    %c1_38 = arith.constant 1 : index
    %28 = vector.load %arg4[%c0_36, %c2_37, %c1_38] : memref<4x16x16xbf16, #tpu.memory_space<vmem>>, vector<4x14x14xbf16>
    %29 = vector.shape_cast %28 : vector<4x14x14xbf16> to vector<4x196xbf16>
    %c28 = arith.constant 28 : index
    %c0_39 = arith.constant 0 : index
    %30 = vector.load %arg5[%c28, %c0_39] : memref<48x256xbf16, #tpu.memory_space<vmem>>, vector<4x196xbf16>
    tpu.vector_store %arg5[%c28, %c0_39], %29 {strides = array<i32>} : memref<48x256xbf16, #tpu.memory_space<vmem>>, vector<4x196xbf16>,
    %c0_40 = arith.constant 0 : index
    %c2_41 = arith.constant 2 : index
    %c2_42 = arith.constant 2 : index
    %31 = vector.load %arg4[%c0_40, %c2_41, %c2_42] : memref<4x16x16xbf16, #tpu.memory_space<vmem>>, vector<4x14x14xbf16>
    %32 = vector.shape_cast %31 : vector<4x14x14xbf16> to vector<4x196xbf16>
    %c32 = arith.constant 32 : index
    %c0_43 = arith.constant 0 : index
    %33 = vector.load %arg5[%c32, %c0_43] : memref<48x256xbf16, #tpu.memory_space<vmem>>, vector<4x196xbf16>
    tpu.vector_store %arg5[%c32, %c0_43], %32 {strides = array<i32>} : memref<48x256xbf16, #tpu.memory_space<vmem>>, vector<4x196xbf16>,
    %c0_44 = arith.constant 0 : index
    %c0_45 = arith.constant 0 : index
    %34 = vector.load %arg5[%c0_44, %c0_45] : memref<48x256xbf16, #tpu.memory_space<vmem>>, vector<48x256xbf16>
    %cst_46 = arith.constant dense<0.000000e+00> : vector<16x256xf32>
    %35 = tpu.matmul %2, %34, %cst_46 {dimension_numbers = #tpu.dot_dimension_numbers<[1], [0], [0], [1], [0, 0, 1, 1], [], []>} : vector<16x48xbf16>, vector<48x256xbf16>, vector<16x256xf32> -> vector<16x256xf32>
    %c0_47 = arith.constant 0 : index
    %c0_48 = arith.constant 0 : index
    %c0_49 = arith.constant 0 : index
    %36 = vector.load %arg3[%c0_47, %c0_48, %c0_49] : memref<1x16x256xf32, #tpu.memory_space<vmem>>, vector<1x16x256xf32>
    %37 = vector.shape_cast %36 : vector<1x16x256xf32> to vector<16x256xf32>
    %38 = vector.shape_cast %35 : vector<16x256xf32> to vector<1x16x256xf32>
    tpu.vector_store %arg3[%c0_47, %c0_48, %c0_49], %38 {strides = array<i32>} : memref<1x16x256xf32, #tpu.memory_space<vmem>>, vector<1x16x256xf32>,
    return
  }
  func.func @transform_0(%arg0: i32) -> (i32, i32, i32, i32) {
    %c0_i32 = arith.constant 0 : i32
    %c0_i32_0 = arith.constant 0 : i32
    %c0_i32_1 = arith.constant 0 : i32
    %c0_i32_2 = arith.constant 0 : i32
    return %arg0, %c0_i32, %c0_i32_0, %c0_i32_1 : i32, i32, i32, i32
  }
  func.func @transform_1(%arg0: i32) -> (i32, i32) {
    %c0_i32 = arith.constant 0 : i32
    %c0_i32_0 = arith.constant 0 : i32
    %c0_i32_1 = arith.constant 0 : i32
    return %c0_i32, %c0_i32_0 : i32, i32
  }
  func.func @transform_2(%arg0: i32) -> (i32, i32, i32) {
    %c0_i32 = arith.constant 0 : i32
    %c0_i32_0 = arith.constant 0 : i32
    %c0_i32_1 = arith.constant 0 : i32
    return %arg0, %c0_i32, %c0_i32_0 : i32, i32, i32
  }
}

</mosaic_0001>

<llo_original>
// kernel: tpu_custom_call.1
$region0: #{tpu_custom_call.1}
  #allocation0 [shape = 'u32[]', space=smem, size = 0x4, offset = 0x4, fixed_abs, tag = 'smem constant byte address 0x4 - core index']
  #allocation1 [shape = 'u32[72,128]{1,0:T(1,128)}', space=vmem, size = 0x9000, scoped, tag = 'internal scratch']
  #allocation2 [shape = 'bf16[4,16,16]{2,1,0:T(8,128)(2,1)}', space=vmem, size = 0x4000, scoped, tag = 'scratch operand']
  #allocation3 [shape = 'bf16[48,256]{1,0:T(8,128)(2,1)}', space=vmem, size = 0x6000, scoped, tag = 'scratch operand']
  %s0 = inlined_call_operand.hbm [shape: f32[2,4,16,16], index: 0, kind: input, shape index: {}]
  %s1 = inlined_call_operand.hbm [shape: bf16[16,48], index: 1, kind: input, shape index: {}]
  %s2 = inlined_call_operand.hbm [shape: f32[2,16,256], index: 2, kind: output, shape index: {}]
  %s3 = sld [smem:[#allocation0]]
  $region49: #{tpu_custom_call.1} parent=0
    _
  %s5 = ssub.s32 1, %s3
  %s6 = scalar_select 0, %s5, %s3
  $region1: #{tpu_custom_call.1} parent=0
    #allocation4 [shape = 'u8[65536]{0}', space=vmem, size = 0x10000, scoped, tag = 'input window, operand 0']
    #allocation5 [shape = 's32[2]{0}', space=sflag, size = 0x8, scoped, tag = 'scoped memory for tpu_custom_call.1']
    #allocation6 [shape = 's32[2]{0}', space=sflag, size = 0x8, scoped, tag = 'scoped memory for tpu_custom_call.1']
    #allocation7 [shape = 'u8[4096]{0}', space=vmem, size = 0x1000, scoped, tag = 'input window, operand 1, single buffered']
    #allocation8 [shape = 's32[1]{0}', space=sflag, size = 0x4, scoped, tag = 'scoped memory for tpu_custom_call.1']
    #allocation9 [shape = 'u8[32768]{0}', space=vmem, size = 0x8000, scoped, tag = 'output window, operand 0']
    %7 = vsyncpa [#allocation5], 0
    %s8 = scalar_lea.sflag [#allocation5], 1
    %9 = vsyncpa %s8, 0
    %10 = vsyncpa [#allocation8], 0
    %11 = vsyncpa [#allocation6], 0
    %s12 = scalar_lea.sflag [#allocation6], 1
    %13 = vsyncpa %s12, 0
    loop: start=0, step=1, limit=4
    $region2: #{tpu_custom_call.1} parent=1 // loop_pre_header
      _
    $region3: #{tpu_custom_call.1} parent=1 // loop_header
      %s15 = sphi 0, %s19
      %p16 = scmp.ge.s32.totalorder %s15, 4
      %s25 = sphi 0, %s27
      %s28 = sphi 0, %s25
      %s29 = sphi 0, %s28
      %s45 = sphi 0, %s29
      %s49 = sphi 0, %s49
      %s51 = sphi 0, %s49
      %s52 = sphi 0, %s51
      %s66 = sphi 0, %s52
      %s72 = sphi 0, %s74
      %s75 = sphi 0, %s72
      %s76 = sphi 0, %s75
      %s92 = sphi 0, %s76
    $region4: #{tpu_custom_call.1} parent=1 // loop_header_branch
      %18 = sbr.rel (%p16) target = $region8
    $region5: #{tpu_custom_call.1} parent=1 // loop_body
      %s20 = ssub.s32 %s15, 1
      %s21 = ssub.s32 %s15, 2
      %s22 = sadd.s32 %s15, 1
      %s23 = ssub.s32 %s15, %s22
      %p24 = scmp.eq.s32.totalorder %s23, 0
      %s26 = sadd.s32 %s25, 1
      %s27 = scalar_select %p24, %s25, %s26
      %p30 = pneg %p24
      %p31 = scmp.eq.s32.totalorder %s15, 1
      %p32 = por %p30, %p31
      %p33 = scmp.ne.s32.totalorder %s25, %s28
      %p34 = scmp.eq.s32.totalorder %s15, 0
      %p35 = por %p33, %p34
      %p36 = scmp.ne.s32.totalorder %s25, %s28
      %p37 = scmp.eq.s32.totalorder %s20, 1
      %p38 = por %p36, %p37
      %p39 = scmp.ne.s32.totalorder %s28, %s29
      %p40 = scmp.eq.s32.totalorder %s20, 0
      %p41 = por %p39, %p40
      %p42 = scmp.ne.s32.totalorder %s28, %s29
      %p43 = scmp.eq.s32.totalorder %s21, 1
      %p44 = por %p42, %p43
      %p46 = scmp.ne.s32.totalorder %s29, %s45
      %p47 = scmp.eq.s32.totalorder %s21, 0
      %p48 = por %p46, %p47
      %s50 = sadd.s32 %s49, 1
      %p53 = scmp.eq.s32.totalorder %s15, 1
      %p54 = scmp.ne.s32.totalorder %s49, %s51
      %p55 = scmp.eq.s32.totalorder %s15, 0
      %p56 = por %p54, %p55
      %p57 = scmp.ne.s32.totalorder %s49, %s51
      %p58 = scmp.eq.s32.totalorder %s20, 1
      %p59 = por %p57, %p58
      %p60 = scmp.ne.s32.totalorder %s51, %s52
      %p61 = scmp.eq.s32.totalorder %s20, 0
      %p62 = por %p60, %p61
      %p63 = scmp.ne.s32.totalorder %s51, %s52
      %p64 = scmp.eq.s32.totalorder %s21, 1
      %p65 = por %p63, %p64
      %p67 = scmp.ne.s32.totalorder %s52, %s66
      %p68 = scmp.eq.s32.totalorder %s21, 0
      %p69 = por %p67, %p68
      %s70 = ssub.s32 %s15, %s22
      %p71 = scmp.eq.s32.totalorder %s70, 0
      %s73 = sadd.s32 %s72, 1
      %s74 = scalar_select %p71, %s72, %s73
      %p77 = pneg %p71
      %p78 = scmp.eq.s32.totalorder %s15, 1
      %p79 = por %p77, %p78
      %p80 = scmp.ne.s32.totalorder %s72, %s75
      %p81 = scmp.eq.s32.totalorder %s15, 0
      %p82 = por %p80, %p81
      %p83 = scmp.ne.s32.totalorder %s72, %s75
      %p84 = scmp.eq.s32.totalorder %s20, 1
      %p85 = por %p83, %p84
      %p86 = scmp.ne.s32.totalorder %s75, %s76
      %p87 = scmp.eq.s32.totalorder %s20, 0
      %p88 = por %p86, %p87
      %p89 = scmp.ne.s32.totalorder %s75, %s76
      %p90 = scmp.eq.s32.totalorder %s21, 1
      %p91 = por %p89, %p90
      %p93 = scmp.ne.s32.totalorder %s76, %s92
      %p94 = scmp.eq.s32.totalorder %s21, 0
      %p95 = por %p93, %p94
      %p96 = scmp.le.s32.totalorder 1, %s15
      %p97 = scmp.lt.s32.totalorder %s15, 3
      %p98 = pnand %p96, %p97
      %p99 = pneg %p98
      // Predicated region
      $region9: #{tpu_custom_call.1} parent=5 // pred_check
        _
      $region10: #{tpu_custom_call.1} parent=5 // pred_check_branch
        %101 = sbr.rel (%p98) target = $region12
      $region11: #{tpu_custom_call.1} parent=5 // pred_region
        %s102 = ssub.s32 %s15, 1
        // Predicated region
        $region13: #{tpu_custom_call.1} parent=11 // pred_check
          %p103 = pneg %p62
        $region14: #{tpu_custom_call.1} parent=11 // pred_check_branch
          %105 = sbr.rel (%p103) target = $region16
        $region15: #{tpu_custom_call.1} parent=11 // pred_region
          %107 = vsyncadd [#allocation8], 0
          %s108 = sshll.u32 %s1, 4
          %s109 = int_to_ptr.hbm [resolvable:$true] %s108
          %s110 = sshll.u32 [#allocation7], 4
          %s111 = int_to_ptr.vmem [resolvable:$true] %s110
          %116 = dma.hbm_to_vmem [thread:$0]  %s109, 128, %s111, [#allocation8], 64, 64, 4
        $region16: #{tpu_custom_call.1} parent=11 // pred_fallthru
          _
      $region12: #{tpu_custom_call.1} parent=5 // pred_fallthru
        _
      %p117 = scmp.lt.s32.totalorder %s15, 2
      // Predicated region
      $region17: #{tpu_custom_call.1} parent=5 // pred_check
        %p118 = pneg %p117
      $region18: #{tpu_custom_call.1} parent=5 // pred_check_branch
        %120 = sbr.rel (%p118) target = $region20
      $region19: #{tpu_custom_call.1} parent=5 // pred_region
        // Predicated region
        $region21: #{tpu_custom_call.1} parent=19 // pred_check
          %p121 = pneg %p35
        $region22: #{tpu_custom_call.1} parent=19 // pred_check_branch
          %123 = sbr.rel (%p121) target = $region24
        $region23: #{tpu_custom_call.1} parent=19 // pred_region
          %s124 = sand.u32 %s25, 1
          %s125 = scalar_lea.sflag [#allocation5], %s124
          %s126 = sand.u32 %s25, 1
          %s127 = smul.addr %s126, 64
          %s128 = scalar_lea.vmem [#allocation4], %s127
          %130 = vsyncadd %s125, 0
          %s131 = smul.addr %s15, 8
          %s132 = smul.addr %s131, 8
          %s133 = scalar_lea.hbm %s0, %s132
          %s134 = sshll.u32 %s133, 4
          %s135 = int_to_ptr.hbm [resolvable:$true] %s134
          %s136 = sshll.u32 %s128, 4
          %s137 = int_to_ptr.vmem [resolvable:$true] %s136
          %142 = dma.hbm_to_vmem [thread:$0]  %s135, 1024, %s137, %s125, 128, 128, 8
        $region24: #{tpu_custom_call.1} parent=19 // pred_fallthru
          _
      $region20: #{tpu_custom_call.1} parent=5 // pred_fallthru
        _
      %p143 = scmp.le.s32.totalorder 1, %s15
      %p144 = scmp.lt.s32.totalorder %s15, 3
      %p145 = pnand %p143, %p144
      %p146 = pneg %p145
      // Predicated region
      $region25: #{tpu_custom_call.1} parent=5 // pred_check
        _
      $region26: #{tpu_custom_call.1} parent=5 // pred_check_branch
        %148 = sbr.rel (%p145) target = $region28
      $region27: #{tpu_custom_call.1} parent=5 // pred_region
        %s149 = ssub.s32 %s15, 1
        %s150 = sand.u32 %s28, 1
        %s151 = scalar_lea.sflag [#allocation5], %s150
        %s152 = sand.u32 %s28, 1
        %s153 = smul.addr %s152, 64
        %s154 = scalar_lea.vmem [#allocation4], %s153
        // Predicated region
        $region29: #{tpu_custom_call.1} parent=27 // pred_check
          %p155 = pneg %p41
        $region30: #{tpu_custom_call.1} parent=27 // pred_check_branch
          %157 = sbr.rel (%p155) target = $region32
        $region31: #{tpu_custom_call.1} parent=27 // pred_region
          %159 = dma.done %s151, 1024
        $region32: #{tpu_custom_call.1} parent=27 // pred_fallthru
          _
        // Predicated region
        $region33: #{tpu_custom_call.1} parent=27 // pred_check
          %p160 = pneg %p62
        $region34: #{tpu_custom_call.1} parent=27 // pred_check_branch
          %162 = sbr.rel (%p160) target = $region36
        $region35: #{tpu_custom_call.1} parent=27 // pred_region
          %164 = dma.done [#allocation8], 128
        $region36: #{tpu_custom_call.1} parent=27 // pred_fallthru
          _
        %s165 = sand.u32 %s28, 1
        %s166 = scalar_lea.sflag [#allocation5], %s165
        %s167 = sand.u32 %s28, 1
        %s168 = smul.addr %s167, 64
        %s169 = scalar_lea.vmem [#allocation4], %s168
        %p170 = pneg %p41
        %p171 = pneg %p38
        %p172 = pneg %p62
        %p173 = pneg %p59
        %p174 = pneg %p88
        %p175 = pneg %p85
        %s176 = sand.u32 %s75, 1
        %s177 = scalar_lea.sflag [#allocation6], %s176
        %s178 = sand.u32 %s75, 1
        %s179 = smul.addr %s178, 32
        %s180 = scalar_lea.vmem [#allocation9], %s179
        %182 = vst [vmem:[#allocation3 + $0x20] sm:$0xcc] 0
        %183 = vst [vmem:[#allocation3 + $0x28] sm:$0xff] 0
        %v184 = vld [vmem:[#allocation7] sm:$0xf]
        %v185 = vld [vmem:[#allocation7 + $0x4] sm:$0xf]
        %v186 = vld [vmem:[%s154] sm:$0xff]
        %v187 = vld [vmem:[%s154 + $0x8] sm:$0xff]
        %v188 = vld [vmem:[%s154 + $0x10] sm:$0xff]
        %v189 = vld [vmem:[%s154 + $0x18] sm:$0xff]
        %v190 = vld [vmem:[%s154 + $0x20] sm:$0xff]
        %v191 = vld [vmem:[%s154 + $0x28] sm:$0xff]
        %v192 = vld [vmem:[%s154 + $0x30] sm:$0xff]
        %v193 = vld [vmem:[%s154 + $0x38] sm:$0xff]
        %v194 = vpack.c.bf16 %v186, %v186
        %v195 = vpack.c.bf16 %v187, %v187
        %v196 = vpack.c.bf16 %v188, %v188
        %v197 = vpack.c.bf16 %v189, %v189
        %v198 = vpack.c.bf16 %v190, %v190
        %v199 = vpack.c.bf16 %v191, %v191
        %v200 = vpack.c.bf16 %v192, %v192
        %v201 = vpack.c.bf16 %v193, %v193
        %vm202 = vcmask 125952
        %203 = vst.msk [vmem:[#allocation2] sm:$0xf] %vm202, %v194
        %204 = vst.msk [vmem:[#allocation2 + $0x4] sm:$0xf] %vm202, %v195
        %205 = vst.msk [vmem:[#allocation2 + $0x8] sm:$0xf] %vm202, %v196
        %206 = vst.msk [vmem:[#allocation2 + $0xc] sm:$0xf] %vm202, %v197
        %207 = vst.msk [vmem:[#allocation2 + $0x10] sm:$0xf] %vm202, %v198
        %208 = vst.msk [vmem:[#allocation2 + $0x14] sm:$0xf] %vm202, %v199
        %209 = vst.msk [vmem:[#allocation2 + $0x18] sm:$0xf] %vm202, %v200
        %210 = vst.msk [vmem:[#allocation2 + $0x1c] sm:$0xf] %vm202, %v201
        %v211 = vld [vmem:[#allocation2] sm:$0xf]
        %v213 = vunpack.c.l.s4 1983009808
        %v214 = vunpack.c.0.s8 %v213
        %v215 = vperm.slane %v211, %v214
        %v216 = vld [vmem:[#allocation2 + $0x10] sm:$0xf]
        %v218 = vunpack.c.l.s4 1983009808
        %v219 = vunpack.c.0.s8 %v218
        %v220 = vperm.slane %v216, %v219
        %v221 = vrot.slane %v220, 4
        %vm222 = vcmask 1047556
        %v223 = vsel %vm222, %v221, %v215
        %v224 = vrot.slane %v215, 4
        %v225 = vsel %vm222, %v220, %v224
        %v227 = vunpack.c.l.s4 1934713408
        %v228 = vunpack.c.0.s8 %v227
        %v229 = vperm.slane %v223, %v228
        %v231 = vunpack.c.l.s4 1934713408
        %v232 = vunpack.c.0.s8 %v231
        %v233 = vperm.slane %v225, %v232
        %v234 = vrot.slane %v229, 4
        %v235 = vsel %vm222, 0, %v234
        %v236 = vrot.slane %v233, 4
        %v237 = vsel %vm222, 0, %v236
        %v238 = vld [vmem:[#allocation2 + $0x8] sm:$0xf]
        %v240 = vunpack.c.l.s4 1983009808
        %v241 = vunpack.c.0.s8 %v240
        %v242 = vperm.slane %v238, %v241
        %v243 = vld [vmem:[#allocation2 + $0x18] sm:$0xf]
        %v245 = vunpack.c.l.s4 1983009808
        %v246 = vunpack.c.0.s8 %v245
        %v247 = vperm.slane %v243, %v246
        %v248 = vrot.slane %v247, 4
        %v249 = vsel %vm222, %v248, %v242
        %v250 = vrot.slane %v242, 4
        %v251 = vsel %vm222, %v247, %v250
        %v253 = vunpack.c.l.s4 1934713408
        %v254 = vunpack.c.0.s8 %v253
        %v255 = vperm.slane %v249, %v254
        %v257 = vunpack.c.l.s4 1934713408
        %v258 = vunpack.c.0.s8 %v257
        %v259 = vperm.slane %v251, %v258
        %v260 = vrot.slane %v255, 4
        %v261 = vsel %vm222, 0, %v260
        %v262 = vrot.slane %v259, 4
        %v263 = vsel %vm222, 0, %v262
        %v264 = vld [vmem:[#allocation2 + $0x4] sm:$0x7]
        %v266 = vunpack.c.l.s4 1983009808
        %v267 = vunpack.c.0.s8 %v266
        %v268 = vperm.slane %v264, %v267
        %v269 = vld [vmem:[#allocation2 + $0x14] sm:$0x7]
        %v271 = vunpack.c.l.s4 1983009808
        %v272 = vunpack.c.0.s8 %v271
        %v273 = vperm.slane %v269, %v272
        %v274 = vrot.slane %v273, 4
        %v275 = vsel %vm222, %v274, %v268
        %v276 = vrot.slane %v268, 4
        %v277 = vsel %vm222, %v273, %v276
        %v279 = vunpack.c.l.s4 1934713408
        %v280 = vunpack.c.0.s8 %v279
        %v281 = vperm.slane %v275, %v280
        %v282 = vrot.slane %v281, 4
        %v283 = vsel %vm222, 0, %v282
        %v285 = vunpack.c.l.s4 1934713408
        %v286 = vunpack.c.0.s8 %v285
        %v287 = vperm.slane %v277, %v286
        %v288 = vld [vmem:[#allocation2 + $0xc] sm:$0x7]
        %v290 = vunpack.c.l.s4 1983009808
        %v291 = vunpack.c.0.s8 %v290
        %v292 = vperm.slane %v288, %v291
        %v293 = vld [vmem:[#allocation2 + $0x1c] sm:$0x7]
        %v295 = vunpack.c.l.s4 1983009808
        %v296 = vunpack.c.0.s8 %v295
        %v297 = vperm.slane %v293, %v296
        %v298 = vrot.slane %v297, 4
        %v299 = vsel %vm222, %v298, %v292
        %v300 = vrot.slane %v292, 4
        %v301 = vsel %vm222, %v297, %v300
        %v303 = vunpack.c.l.s4 1934713408
        %v304 = vunpack.c.0.s8 %v303
        %v305 = vperm.slane %v299, %v304
        %v306 = vrot.slane %v305, 4
        %v307 = vsel %vm222, 0, %v306
        %v309 = vunpack.c.l.s4 1934713408
        %v310 = vunpack.c.0.s8 %v309
        %v311 = vperm.slane %v301, %v310
        %v314 = vpack.i.b16 %v255, %v229
        %v315 = vshrl.u32 %v229, 16
        %v316 = vshrl.u32 %v255, 16
        %v317 = vpack.i.b16 %v316, %v315
        %v320 = vpack.i.b16 %v261, %v235
        %v321 = vshrl.u32 %v235, 16
        %v322 = vshrl.u32 %v261, 16
        %v323 = vpack.i.b16 %v322, %v321
        %v326 = vpack.i.b16 %v259, %v233
        %v327 = vshrl.u32 %v233, 16
        %v328 = vshrl.u32 %v259, 16
        %v329 = vpack.i.b16 %v328, %v327
        %v332 = vpack.i.b16 %v263, %v237
        %v333 = vshrl.u32 %v237, 16
        %v334 = vshrl.u32 %v263, 16
        %v335 = vpack.i.b16 %v334, %v333
        %v338 = vpack.i.b16 %v305, %v281
        %v339 = vshrl.u32 %v281, 16
        %v340 = vshrl.u32 %v305, 16
        %v341 = vpack.i.b16 %v340, %v339
        %v344 = vpack.i.b16 %v307, %v283
        %v345 = vshrl.u32 %v283, 16
        %v346 = vshrl.u32 %v307, 16
        %v347 = vpack.i.b16 %v346, %v345
        %v350 = vpack.i.b16 %v311, %v287
        %v351 = vshrl.u32 %v287, 16
        %v352 = vshrl.u32 %v311, 16
        %v353 = vpack.i.b16 %v352, %v351
        %v354 = vunpack.c.l.b16 %v317
        %v355 = vpack.c.b16 %v354, %v354
        %356 = vrot.lane.b32.xlu0 %v355, 14
        %v357 = vpop.permute.xlu0 %356
        %v358 = vunpack.c.l.b16 %v320
        %v359 = vpack.c.b16 %v358, %v358
        %360 = vrot.lane.b32.xlu0 %v359, 28
        %v361 = vpop.permute.xlu0 %360
        %v362 = vunpack.c.l.b16 %v323
        %v363 = vpack.c.b16 %v362, %v362
        %364 = vrot.lane.b32.xlu0 %v363, 42
        %v365 = vpop.permute.xlu0 %364
        %v366 = vunpack.c.l.b16 %v326
        %v367 = vpack.c.b16 %v366, %v366
        %368 = vrot.lane.b32.xlu0 %v367, 56
        %v369 = vpop.permute.xlu0 %368
        %v370 = vunpack.c.l.b16 %v329
        %v371 = vpack.c.b16 %v370, %v370
        %372 = vrot.lane.b32.xlu0 %v371, 70
        %v373 = vpop.permute.xlu0 %372
        %v374 = vunpack.c.l.b16 %v332
        %v375 = vpack.c.b16 %v374, %v374
        %376 = vrot.lane.b32.xlu0 %v375, 84
        %v377 = vpop.permute.xlu0 %376
        %v378 = vunpack.c.l.b16 %v335
        %v379 = vpack.c.b16 %v378, %v378
        %380 = vrot.lane.b32.xlu0 %v379, 98
        %v381 = vpop.permute.xlu0 %380
        %v382 = vunpack.c.l.b16 %v338
        %v383 = vpack.c.b16 %v382, %v382
        %384 = vrot.lane.b32.xlu0 %v383, 112
        %v385 = vpop.permute.xlu0 %384
        %v386 = vunpack.c.l.b16 %v341
        %v387 = vpack.c.b16 %v386, %v386
        %388 = vrot.lane.b32.xlu0 %v387, 126
        %v389 = vpop.permute.xlu0 %388
        %v390 = vunpack.c.l.b16 %v344
        %v391 = vpack.c.b16 %v390, %v390
        %392 = vrot.lane.b32.xlu0 %v391, 12
        %v393 = vpop.permute.xlu0 %392
        %v394 = vunpack.c.l.b16 %v347
        %v395 = vpack.c.b16 %v394, %v394
        %396 = vrot.lane.b32.xlu0 %v395, 26
        %v397 = vpop.permute.xlu0 %396
        %v398 = vunpack.c.l.b16 %v350
        %v399 = vpack.c.b16 %v398, %v398
        %400 = vrot.lane.b32.xlu0 %v399, 40
        %v401 = vpop.permute.xlu0 %400
        %v402 = vunpack.c.l.b16 %v353
        %v403 = vpack.c.b16 %v402, %v402
        %404 = vrot.lane.b32.xlu0 %v403, 54
        %v405 = vpop.permute.xlu0 %404
        %vm406 = vcmask 113664
        %v409 = vsel %vm406, %v314, %v357
        %vm410 = vcmask 228352
        %v412 = vsel %vm410, %v409, %v361
        %vm413 = vcmask 343040
        %v415 = vsel %vm413, %v412, %v365
        %vm416 = vcmask 457728
        %v418 = vsel %vm416, %v415, %v369
        %vm419 = vcmask 572416
        %v421 = vsel %vm419, %v418, %v373
        %vm422 = vcmask 687104
        %v424 = vsel %vm422, %v421, %v377
        %vm425 = vcmask 801792
        %v427 = vsel %vm425, %v424, %v381
        %vm428 = vcmask 916480
        %v430 = vsel %vm428, %v427, %v385
        %vm431 = vcmask 1031168
        %v433 = vsel %vm431, %v430, %v389
        %vm434 = vcmask 97280
        %v436 = vsel %vm434, %v389, %v393
        %vm437 = vcmask 211968
        %v439 = vsel %vm437, %v436, %v397
        %vm440 = vcmask 326656
        %v442 = vsel %vm440, %v439, %v401
        %vm443 = vcmask 441344
        %v445 = vsel %vm443, %v442, %v405
        %v448 = vunpack.c.l.b16 %v433
        %v449 = vunpack.c.l.b16 %v445
        %v450 = vpack.c.b16 %v449, %v448
        %vm452 = vcmask 1041408
        %vm453 = vcmask 553988
        %vm454 = vmor %vm453, %vm452
        %455 = vst.msk [vmem:[#allocation3] sm:$0x33] %vm454, %v450
        %v456 = vld [vmem:[#allocation2] sm:$0xf]
        %v457 = vld [vmem:[#allocation2 + $0x4] sm:$0x7]
        %v458 = vld [vmem:[#allocation2 + $0x8] sm:$0xf]
        %v459 = vld [vmem:[#allocation2 + $0xc] sm:$0x7]
        %v460 = vld [vmem:[#allocation2 + $0x10] sm:$0xf]
        %v461 = vld [vmem:[#allocation2 + $0x14] sm:$0x7]
        %v462 = vld [vmem:[#allocation2 + $0x18] sm:$0xf]
        %v463 = vld [vmem:[#allocation2 + $0x1c] sm:$0x7]
        %472 = vrot.lane.b32.xlu0 %v456, 127
        %v473 = vpop.permute.xlu0 %472
        %474 = vrot.lane.b32.xlu0 %v457, 127
        %v475 = vpop.permute.xlu0 %474
        %476 = vrot.lane.b32.xlu0 %v458, 127
        %v477 = vpop.permute.xlu0 %476
        %478 = vrot.lane.b32.xlu0 %v459, 127
        %v479 = vpop.permute.xlu0 %478
        %480 = vrot.lane.b32.xlu0 %v460, 127
        %v481 = vpop.permute.xlu0 %480
        %482 = vrot.lane.b32.xlu0 %v461, 127
        %v483 = vpop.permute.xlu0 %482
        %484 = vrot.lane.b32.xlu0 %v462, 127
        %v485 = vpop.permute.xlu0 %484
        %486 = vrot.lane.b32.xlu0 %v463, 127
        %v487 = vpop.permute.xlu0 %486
        %v490 = vunpack.c.l.s4 1983009808
        %v491 = vunpack.c.0.s8 %v490
        %v492 = vperm.slane %v473, %v491
        %v495 = vunpack.c.l.s4 1983009808
        %v496 = vunpack.c.0.s8 %v495
        %v497 = vperm.slane %v481, %v496
        %v498 = vrot.slane %v497, 4
        %v499 = vsel %vm222, %v498, %v492
        %v500 = vrot.slane %v492, 4
        %v501 = vsel %vm222, %v497, %v500
        %v503 = vunpack.c.l.s4 1934713408
        %v504 = vunpack.c.0.s8 %v503
        %v505 = vperm.slane %v499, %v504
        %v507 = vunpack.c.l.s4 1934713408
        %v508 = vunpack.c.0.s8 %v507
        %v509 = vperm.slane %v501, %v508
        %v510 = vrot.slane %v505, 4
        %v511 = vsel %vm222, 0, %v510
        %v512 = vrot.slane %v509, 4
        %v513 = vsel %vm222, 0, %v512
        %v516 = vunpack.c.l.s4 1983009808
        %v517 = vunpack.c.0.s8 %v516
        %v518 = vperm.slane %v477, %v517
        %v521 = vunpack.c.l.s4 1983009808
        %v522 = vunpack.c.0.s8 %v521
        %v523 = vperm.slane %v485, %v522
        %v524 = vrot.slane %v523, 4
        %v525 = vsel %vm222, %v524, %v518
        %v526 = vrot.slane %v518, 4
        %v527 = vsel %vm222, %v523, %v526
        %v529 = vunpack.c.l.s4 1934713408
        %v530 = vunpack.c.0.s8 %v529
        %v531 = vperm.slane %v525, %v530
        %v533 = vunpack.c.l.s4 1934713408
        %v534 = vunpack.c.0.s8 %v533
        %v535 = vperm.slane %v527, %v534
        %v536 = vrot.slane %v531, 4
        %v537 = vsel %vm222, 0, %v536
        %v538 = vrot.slane %v535, 4
        %v539 = vsel %vm222, 0, %v538
        %v542 = vunpack.c.l.s4 1983009808
        %v543 = vunpack.c.0.s8 %v542
        %v544 = vperm.slane %v475, %v543
        %v547 = vunpack.c.l.s4 1983009808
        %v548 = vunpack.c.0.s8 %v547
        %v549 = vperm.slane %v483, %v548
        %v550 = vrot.slane %v549, 4
        %v551 = vsel %vm222, %v550, %v544
        %v552 = vrot.slane %v544, 4
        %v553 = vsel %vm222, %v549, %v552
        %v555 = vunpack.c.l.s4 1934713408
        %v556 = vunpack.c.0.s8 %v555
        %v557 = vperm.slane %v551, %v556
        %v558 = vrot.slane %v557, 4
        %v559 = vsel %vm222, 0, %v558
        %v561 = vunpack.c.l.s4 1934713408
        %v562 = vunpack.c.0.s8 %v561
        %v563 = vperm.slane %v553, %v562
        %v566 = vunpack.c.l.s4 1983009808
        %v567 = vunpack.c.0.s8 %v566
        %v568 = vperm.slane %v479, %v567
        %v571 = vunpack.c.l.s4 1983009808
        %v572 = vunpack.c.0.s8 %v571
        %v573 = vperm.slane %v487, %v572
        %v574 = vrot.slane %v573, 4
        %v575 = vsel %vm222, %v574, %v568
        %v576 = vrot.slane %v568, 4
        %v577 = vsel %vm222, %v573, %v576
        %v579 = vunpack.c.l.s4 1934713408
        %v580 = vunpack.c.0.s8 %v579
        %v581 = vperm.slane %v575, %v580
        %v582 = vrot.slane %v581, 4
        %v583 = vsel %vm222, 0, %v582
        %v585 = vunpack.c.l.s4 1934713408
        %v586 = vunpack.c.0.s8 %v585
        %v587 = vperm.slane %v577, %v586
        %v590 = vpack.i.b16 %v531, %v505
        %v591 = vshrl.u32 %v505, 16
        %v592 = vshrl.u32 %v531, 16
        %v593 = vpack.i.b16 %v592, %v591
        %v596 = vpack.i.b16 %v537, %v511
        %v597 = vshrl.u32 %v511, 16
        %v598 = vshrl.u32 %v537, 16
        %v599 = vpack.i.b16 %v598, %v597
        %v602 = vpack.i.b16 %v535, %v509
        %v603 = vshrl.u32 %v509, 16
        %v604 = vshrl.u32 %v535, 16
        %v605 = vpack.i.b16 %v604, %v603
        %v608 = vpack.i.b16 %v539, %v513
        %v609 = vshrl.u32 %v513, 16
        %v610 = vshrl.u32 %v539, 16
        %v611 = vpack.i.b16 %v610, %v609
        %v614 = vpack.i.b16 %v581, %v557
        %v615 = vshrl.u32 %v557, 16
        %v616 = vshrl.u32 %v581, 16
        %v617 = vpack.i.b16 %v616, %v615
        %v620 = vpack.i.b16 %v583, %v559
        %v621 = vshrl.u32 %v559, 16
        %v622 = vshrl.u32 %v583, 16
        %v623 = vpack.i.b16 %v622, %v621
        %v626 = vpack.i.b16 %v587, %v563
        %v627 = vshrl.u32 %v563, 16
        %v628 = vshrl.u32 %v587, 16
        %v629 = vpack.i.b16 %v628, %v627
        %v630 = vunpack.c.l.b16 %v593
        %v631 = vpack.c.b16 %v630, %v630
        %632 = vrot.lane.b32.xlu0 %v631, 14
        %v633 = vpop.permute.xlu0 %632
        %v634 = vunpack.c.l.b16 %v596
        %v635 = vpack.c.b16 %v634, %v634
        %636 = vrot.lane.b32.xlu0 %v635, 28
        %v637 = vpop.permute.xlu0 %636
        %v638 = vunpack.c.l.b16 %v599
        %v639 = vpack.c.b16 %v638, %v638
        %640 = vrot.lane.b32.xlu0 %v639, 42
        %v641 = vpop.permute.xlu0 %640
        %v642 = vunpack.c.l.b16 %v602
        %v643 = vpack.c.b16 %v642, %v642
        %644 = vrot.lane.b32.xlu0 %v643, 56
        %v645 = vpop.permute.xlu0 %644
        %v646 = vunpack.c.l.b16 %v605
        %v647 = vpack.c.b16 %v646, %v646
        %648 = vrot.lane.b32.xlu0 %v647, 70
        %v649 = vpop.permute.xlu0 %648
        %v650 = vunpack.c.l.b16 %v608
        %v651 = vpack.c.b16 %v650, %v650
        %652 = vrot.lane.b32.xlu0 %v651, 84
        %v653 = vpop.permute.xlu0 %652
        %v654 = vunpack.c.l.b16 %v611
        %v655 = vpack.c.b16 %v654, %v654
        %656 = vrot.lane.b32.xlu0 %v655, 98
        %v657 = vpop.permute.xlu0 %656
        %v658 = vunpack.c.l.b16 %v614
        %v659 = vpack.c.b16 %v658, %v658
        %660 = vrot.lane.b32.xlu0 %v659, 112
        %v661 = vpop.permute.xlu0 %660
        %v662 = vunpack.c.l.b16 %v617
        %v663 = vpack.c.b16 %v662, %v662
        %664 = vrot.lane.b32.xlu0 %v663, 126
        %v665 = vpop.permute.xlu0 %664
        %v666 = vunpack.c.l.b16 %v620
        %v667 = vpack.c.b16 %v666, %v666
        %668 = vrot.lane.b32.xlu0 %v667, 12
        %v669 = vpop.permute.xlu0 %668
        %v670 = vunpack.c.l.b16 %v623
        %v671 = vpack.c.b16 %v670, %v670
        %672 = vrot.lane.b32.xlu0 %v671, 26
        %v673 = vpop.permute.xlu0 %672
        %v674 = vunpack.c.l.b16 %v626
        %v675 = vpack.c.b16 %v674, %v674
        %676 = vrot.lane.b32.xlu0 %v675, 40
        %v677 = vpop.permute.xlu0 %676
        %v678 = vunpack.c.l.b16 %v629
        %v679 = vpack.c.b16 %v678, %v678
        %680 = vrot.lane.b32.xlu0 %v679, 54
        %v681 = vpop.permute.xlu0 %680
        %v684 = vsel %vm406, %v590, %v633
        %v686 = vsel %vm410, %v684, %v637
        %v688 = vsel %vm413, %v686, %v641
        %v690 = vsel %vm416, %v688, %v645
        %v692 = vsel %vm419, %v690, %v649
        %v694 = vsel %vm422, %v692, %v653
        %v696 = vsel %vm425, %v694, %v657
        %v698 = vsel %vm428, %v696, %v661
        %v700 = vsel %vm431, %v698, %v665
        %v702 = vsel %vm434, %v665, %v669
        %v704 = vsel %vm437, %v702, %v673
        %v706 = vsel %vm440, %v704, %v677
        %v708 = vsel %vm443, %v706, %v681
        %v711 = vunpack.c.l.b16 %v700
        %v712 = vunpack.c.l.b16 %v708
        %v713 = vpack.c.b16 %v712, %v711
        %v714 = vrot.slane %v713, 6
        %vm716 = vcmask 1043458
        %vm717 = vcmask 556038
        %vm718 = vmor %vm717, %vm716
        %719 = vst.msk [vmem:[#allocation3] sm:$0xcc] %vm718, %v714
        %v720 = vld [vmem:[#allocation2] sm:$0xf]
        %v721 = vld [vmem:[#allocation2 + $0x4] sm:$0x7]
        %v722 = vld [vmem:[#allocation2 + $0x8] sm:$0xf]
        %v723 = vld [vmem:[#allocation2 + $0xc] sm:$0x7]
        %v724 = vld [vmem:[#allocation2 + $0x10] sm:$0xf]
        %v725 = vld [vmem:[#allocation2 + $0x14] sm:$0x7]
        %v726 = vld [vmem:[#allocation2 + $0x18] sm:$0xf]
        %v727 = vld [vmem:[#allocation2 + $0x1c] sm:$0x7]
        %736 = vrot.lane.b32.xlu0 %v720, 126
        %v737 = vpop.permute.xlu0 %736
        %738 = vrot.lane.b32.xlu0 %v721, 126
        %v739 = vpop.permute.xlu0 %738
        %740 = vrot.lane.b32.xlu0 %v722, 126
        %v741 = vpop.permute.xlu0 %740
        %742 = vrot.lane.b32.xlu0 %v723, 126
        %v743 = vpop.permute.xlu0 %742
        %744 = vrot.lane.b32.xlu0 %v724, 126
        %v745 = vpop.permute.xlu0 %744
        %746 = vrot.lane.b32.xlu0 %v725, 126
        %v747 = vpop.permute.xlu0 %746
        %748 = vrot.lane.b32.xlu0 %v726, 126
        %v749 = vpop.permute.xlu0 %748
        %750 = vrot.lane.b32.xlu0 %v727, 126
        %v751 = vpop.permute.xlu0 %750
        %v754 = vunpack.c.l.s4 1983009808
        %v755 = vunpack.c.0.s8 %v754
        %v756 = vperm.slane %v737, %v755
        %v759 = vunpack.c.l.s4 1983009808
        %v760 = vunpack.c.0.s8 %v759
        %v761 = vperm.slane %v745, %v760
        %v762 = vrot.slane %v761, 4
        %v763 = vsel %vm222, %v762, %v756
        %v764 = vrot.slane %v756, 4
        %v765 = vsel %vm222, %v761, %v764
        %v767 = vunpack.c.l.s4 1934713408
        %v768 = vunpack.c.0.s8 %v767
        %v769 = vperm.slane %v763, %v768
        %v771 = vunpack.c.l.s4 1934713408
        %v772 = vunpack.c.0.s8 %v771
        %v773 = vperm.slane %v765, %v772
        %v774 = vrot.slane %v769, 4
        %v775 = vsel %vm222, 0, %v774
        %v776 = vrot.slane %v773, 4
        %v777 = vsel %vm222, 0, %v776
        %v780 = vunpack.c.l.s4 1983009808
        %v781 = vunpack.c.0.s8 %v780
        %v782 = vperm.slane %v741, %v781
        %v785 = vunpack.c.l.s4 1983009808
        %v786 = vunpack.c.0.s8 %v785
        %v787 = vperm.slane %v749, %v786
        %v788 = vrot.slane %v787, 4
        %v789 = vsel %vm222, %v788, %v782
        %v790 = vrot.slane %v782, 4
        %v791 = vsel %vm222, %v787, %v790
        %v793 = vunpack.c.l.s4 1934713408
        %v794 = vunpack.c.0.s8 %v793
        %v795 = vperm.slane %v789, %v794
        %v797 = vunpack.c.l.s4 1934713408
        %v798 = vunpack.c.0.s8 %v797
        %v799 = vperm.slane %v791, %v798
        %v800 = vrot.slane %v795, 4
        %v801 = vsel %vm222, 0, %v800
        %v802 = vrot.slane %v799, 4
        %v803 = vsel %vm222, 0, %v802
        %v806 = vunpack.c.l.s4 1983009808
        %v807 = vunpack.c.0.s8 %v806
        %v808 = vperm.slane %v739, %v807
        %v811 = vunpack.c.l.s4 1983009808
        %v812 = vunpack.c.0.s8 %v811
        %v813 = vperm.slane %v747, %v812
        %v814 = vrot.slane %v813, 4
        %v815 = vsel %vm222, %v814, %v808
        %v816 = vrot.slane %v808, 4
        %v817 = vsel %vm222, %v813, %v816
        %v819 = vunpack.c.l.s4 1934713408
        %v820 = vunpack.c.0.s8 %v819
        %v821 = vperm.slane %v815, %v820
        %v822 = vrot.slane %v821, 4
        %v823 = vsel %vm222, 0, %v822
        %v825 = vunpack.c.l.s4 1934713408
        %v826 = vunpack.c.0.s8 %v825
        %v827 = vperm.slane %v817, %v826
        %v830 = vunpack.c.l.s4 1983009808
        %v831 = vunpack.c.0.s8 %v830
        %v832 = vperm.slane %v743, %v831
        %v835 = vunpack.c.l.s4 1983009808
        %v836 = vunpack.c.0.s8 %v835
        %v837 = vperm.slane %v751, %v836
        %v838 = vrot.slane %v837, 4
        %v839 = vsel %vm222, %v838, %v832
        %v840 = vrot.slane %v832, 4
        %v841 = vsel %vm222, %v837, %v840
        %v843 = vunpack.c.l.s4 1934713408
        %v844 = vunpack.c.0.s8 %v843
        %v845 = vperm.slane %v839, %v844
        %v846 = vrot.slane %v845, 4
        %v847 = vsel %vm222, 0, %v846
        %v849 = vunpack.c.l.s4 1934713408
        %v850 = vunpack.c.0.s8 %v849
        %v851 = vperm.slane %v841, %v850
        %v854 = vpack.i.b16 %v795, %v769
        %v855 = vshrl.u32 %v769, 16
        %v856 = vshrl.u32 %v795, 16
        %v857 = vpack.i.b16 %v856, %v855
        %v860 = vpack.i.b16 %v801, %v775
        %v861 = vshrl.u32 %v775, 16
        %v862 = vshrl.u32 %v801, 16
        %v863 = vpack.i.b16 %v862, %v861
        %v866 = vpack.i.b16 %v799, %v773
        %v867 = vshrl.u32 %v773, 16
        %v868 = vshrl.u32 %v799, 16
        %v869 = vpack.i.b16 %v868, %v867
        %v872 = vpack.i.b16 %v803, %v777
        %v873 = vshrl.u32 %v777, 16
        %v874 = vshrl.u32 %v803, 16
        %v875 = vpack.i.b16 %v874, %v873
        %v878 = vpack.i.b16 %v845, %v821
        %v879 = vshrl.u32 %v821, 16
        %v880 = vshrl.u32 %v845, 16
        %v881 = vpack.i.b16 %v880, %v879
        %v884 = vpack.i.b16 %v847, %v823
        %v885 = vshrl.u32 %v823, 16
        %v886 = vshrl.u32 %v847, 16
        %v887 = vpack.i.b16 %v886, %v885
        %v890 = vpack.i.b16 %v851, %v827
        %v891 = vshrl.u32 %v827, 16
        %v892 = vshrl.u32 %v851, 16
        %v893 = vpack.i.b16 %v892, %v891
        %v894 = vunpack.c.l.b16 %v857
        %v895 = vpack.c.b16 %v894, %v894
        %896 = vrot.lane.b32.xlu0 %v895, 14
        %v897 = vpop.permute.xlu0 %896
        %v898 = vunpack.c.l.b16 %v860
        %v899 = vpack.c.b16 %v898, %v898
        %900 = vrot.lane.b32.xlu0 %v899, 28
        %v901 = vpop.permute.xlu0 %900
        %v902 = vunpack.c.l.b16 %v863
        %v903 = vpack.c.b16 %v902, %v902
        %904 = vrot.lane.b32.xlu0 %v903, 42
        %v905 = vpop.permute.xlu0 %904
        %v906 = vunpack.c.l.b16 %v866
        %v907 = vpack.c.b16 %v906, %v906
        %908 = vrot.lane.b32.xlu0 %v907, 56
        %v909 = vpop.permute.xlu0 %908
        %v910 = vunpack.c.l.b16 %v869
        %v911 = vpack.c.b16 %v910, %v910
        %912 = vrot.lane.b32.xlu0 %v911, 70
        %v913 = vpop.permute.xlu0 %912
        %v914 = vunpack.c.l.b16 %v872
        %v915 = vpack.c.b16 %v914, %v914
        %916 = vrot.lane.b32.xlu0 %v915, 84
        %v917 = vpop.permute.xlu0 %916
        %v918 = vunpack.c.l.b16 %v875
        %v919 = vpack.c.b16 %v918, %v918
        %920 = vrot.lane.b32.xlu0 %v919, 98
        %v921 = vpop.permute.xlu0 %920
        %v922 = vunpack.c.l.b16 %v878
        %v923 = vpack.c.b16 %v922, %v922
        %924 = vrot.lane.b32.xlu0 %v923, 112
        %v925 = vpop.permute.xlu0 %924
        %v926 = vunpack.c.l.b16 %v881
        %v927 = vpack.c.b16 %v926, %v926
        %928 = vrot.lane.b32.xlu0 %v927, 126
        %v929 = vpop.permute.xlu0 %928
        %v930 = vunpack.c.l.b16 %v884
        %v931 = vpack.c.b16 %v930, %v930
        %932 = vrot.lane.b32.xlu0 %v931, 12
        %v933 = vpop.permute.xlu0 %932
        %v934 = vunpack.c.l.b16 %v887
        %v935 = vpack.c.b16 %v934, %v934
        %936 = vrot.lane.b32.xlu0 %v935, 26
        %v937 = vpop.permute.xlu0 %936
        %v938 = vunpack.c.l.b16 %v890
        %v939 = vpack.c.b16 %v938, %v938
        %940 = vrot.lane.b32.xlu0 %v939, 40
        %v941 = vpop.permute.xlu0 %940
        %v942 = vunpack.c.l.b16 %v893
        %v943 = vpack.c.b16 %v942, %v942
        %944 = vrot.lane.b32.xlu0 %v943, 54
        %v945 = vpop.permute.xlu0 %944
        %v948 = vsel %vm406, %v854, %v897
        %v950 = vsel %vm410, %v948, %v901
        %v952 = vsel %vm413, %v950, %v905
        %v954 = vsel %vm416, %v952, %v909
        %v956 = vsel %vm419, %v954, %v913
        %v958 = vsel %vm422, %v956, %v917
        %v960 = vsel %vm425, %v958, %v921
        %v962 = vsel %vm428, %v960, %v925
        %v964 = vsel %vm431, %v962, %v929
        %v966 = vsel %vm434, %v929, %v933
        %v968 = vsel %vm437, %v966, %v937
        %v970 = vsel %vm440, %v968, %v941
        %v972 = vsel %vm443, %v970, %v945
        %v975 = vunpack.c.l.b16 %v964
        %v976 = vunpack.c.l.b16 %v972
        %v977 = vpack.c.b16 %v976, %v975
        %979 = vst.msk [vmem:[#allocation3 + $0x8] sm:$0x33] %vm454, %v977
        %v980 = vld [vmem:[#allocation2] sm:$0xf]
        %v981 = vld [vmem:[#allocation2 + $0x4] sm:$0xf]
        %v982 = vld [vmem:[#allocation2 + $0x8] sm:$0xf]
        %v983 = vld [vmem:[#allocation2 + $0xc] sm:$0xf]
        %v984 = vld [vmem:[#allocation2 + $0x10] sm:$0xf]
        %v985 = vld [vmem:[#allocation2 + $0x14] sm:$0xf]
        %v986 = vld [vmem:[#allocation2 + $0x18] sm:$0xf]
        %v987 = vld [vmem:[#allocation2 + $0x1c] sm:$0xf]
        %vm988 = vsmask.f32 3328
        %vm989 = vsmask.f32 7440
        %vm990 = vmor %vm988, %vm989
        %v992 = vshrl.u32 %v980, 16
        %v994 = vrot.slane %v992, 4
        %v995 = vshll.u32 %v980, 16
        %v997 = vrot.slane %v995, 5
        %v998 = vor.u32 %v994, %v997
        %v999 = vrot.slane %v998, 4
        %v1001 = vshll.u32 %v981, 16
        %v1003 = vrot.slane %v1001, 5
        %v1004 = vsel %vm990, %v999, %v1003
        %v1005 = vshrl.u32 %v981, 16
        %v1007 = vrot.slane %v1005, 4
        %v1008 = vor.u32 %v1007, %v1003
        %v1009 = vrot.slane %v1008, 4
        %v1011 = vshrl.u32 %v982, 16
        %v1013 = vrot.slane %v1011, 4
        %v1014 = vshll.u32 %v982, 16
        %v1016 = vrot.slane %v1014, 5
        %v1017 = vor.u32 %v1013, %v1016
        %v1018 = vrot.slane %v1017, 4
        %v1020 = vshll.u32 %v983, 16
        %v1022 = vrot.slane %v1020, 5
        %v1023 = vsel %vm990, %v1018, %v1022
        %v1024 = vshrl.u32 %v983, 16
        %v1026 = vrot.slane %v1024, 4
        %v1027 = vor.u32 %v1026, %v1022
        %v1028 = vrot.slane %v1027, 4
        %v1030 = vshrl.u32 %v984, 16
        %v1032 = vrot.slane %v1030, 4
        %v1033 = vshll.u32 %v984, 16
        %v1035 = vrot.slane %v1033, 5
        %v1036 = vor.u32 %v1032, %v1035
        %v1037 = vrot.slane %v1036, 4
        %v1039 = vshll.u32 %v985, 16
        %v1041 = vrot.slane %v1039, 5
        %v1042 = vsel %vm990, %v1037, %v1041
        %v1043 = vshrl.u32 %v985, 16
        %v1045 = vrot.slane %v1043, 4
        %v1046 = vor.u32 %v1045, %v1041
        %v1047 = vrot.slane %v1046, 4
        %v1049 = vshrl.u32 %v986, 16
        %v1051 = vrot.slane %v1049, 4
        %v1052 = vshll.u32 %v986, 16
        %v1054 = vrot.slane %v1052, 5
        %v1055 = vor.u32 %v1051, %v1054
        %v1056 = vrot.slane %v1055, 4
        %v1058 = vshll.u32 %v987, 16
        %v1060 = vrot.slane %v1058, 5
        %v1061 = vsel %vm990, %v1056, %v1060
        %v1062 = vshrl.u32 %v987, 16
        %v1064 = vrot.slane %v1062, 4
        %v1065 = vor.u32 %v1064, %v1060
        %v1066 = vrot.slane %v1065, 4
        %v1069 = vunpack.c.l.s4 1983009808
        %v1070 = vunpack.c.0.s8 %v1069
        %v1071 = vperm.slane %v1004, %v1070
        %v1074 = vunpack.c.l.s4 1983009808
        %v1075 = vunpack.c.0.s8 %v1074
        %v1076 = vperm.slane %v1042, %v1075
        %v1077 = vrot.slane %v1076, 4
        %v1078 = vsel %vm222, %v1077, %v1071
        %v1079 = vrot.slane %v1071, 4
        %v1080 = vsel %vm222, %v1076, %v1079
        %v1082 = vunpack.c.l.s4 1934713408
        %v1083 = vunpack.c.0.s8 %v1082
        %v1084 = vperm.slane %v1078, %v1083
        %v1086 = vunpack.c.l.s4 1934713408
        %v1087 = vunpack.c.0.s8 %v1086
        %v1088 = vperm.slane %v1080, %v1087
        %v1089 = vrot.slane %v1084, 4
        %v1090 = vsel %vm222, 0, %v1089
        %v1091 = vrot.slane %v1088, 4
        %v1092 = vsel %vm222, 0, %v1091
        %v1095 = vunpack.c.l.s4 1983009808
        %v1096 = vunpack.c.0.s8 %v1095
        %v1097 = vperm.slane %v1023, %v1096
        %v1100 = vunpack.c.l.s4 1983009808
        %v1101 = vunpack.c.0.s8 %v1100
        %v1102 = vperm.slane %v1061, %v1101
        %v1103 = vrot.slane %v1102, 4
        %v1104 = vsel %vm222, %v1103, %v1097
        %v1105 = vrot.slane %v1097, 4
        %v1106 = vsel %vm222, %v1102, %v1105
        %v1108 = vunpack.c.l.s4 1934713408
        %v1109 = vunpack.c.0.s8 %v1108
        %v1110 = vperm.slane %v1104, %v1109
        %v1112 = vunpack.c.l.s4 1934713408
        %v1113 = vunpack.c.0.s8 %v1112
        %v1114 = vperm.slane %v1106, %v1113
        %v1115 = vrot.slane %v1110, 4
        %v1116 = vsel %vm222, 0, %v1115
        %v1117 = vrot.slane %v1114, 4
        %v1118 = vsel %vm222, 0, %v1117
        %v1121 = vunpack.c.l.s4 1983009808
        %v1122 = vunpack.c.0.s8 %v1121
        %v1123 = vperm.slane %v1009, %v1122
        %v1126 = vunpack.c.l.s4 1983009808
        %v1127 = vunpack.c.0.s8 %v1126
        %v1128 = vperm.slane %v1047, %v1127
        %v1129 = vrot.slane %v1128, 4
        %v1130 = vsel %vm222, %v1129, %v1123
        %v1131 = vrot.slane %v1123, 4
        %v1132 = vsel %vm222, %v1128, %v1131
        %v1134 = vunpack.c.l.s4 1934713408
        %v1135 = vunpack.c.0.s8 %v1134
        %v1136 = vperm.slane %v1130, %v1135
        %v1137 = vrot.slane %v1136, 4
        %v1138 = vsel %vm222, 0, %v1137
        %v1140 = vunpack.c.l.s4 1934713408
        %v1141 = vunpack.c.0.s8 %v1140
        %v1142 = vperm.slane %v1132, %v1141
        %v1145 = vunpack.c.l.s4 1983009808
        %v1146 = vunpack.c.0.s8 %v1145
        %v1147 = vperm.slane %v1028, %v1146
        %v1150 = vunpack.c.l.s4 1983009808
        %v1151 = vunpack.c.0.s8 %v1150
        %v1152 = vperm.slane %v1066, %v1151
        %v1153 = vrot.slane %v1152, 4
        %v1154 = vsel %vm222, %v1153, %v1147
        %v1155 = vrot.slane %v1147, 4
        %v1156 = vsel %vm222, %v1152, %v1155
        %v1158 = vunpack.c.l.s4 1934713408
        %v1159 = vunpack.c.0.s8 %v1158
        %v1160 = vperm.slane %v1154, %v1159
        %v1161 = vrot.slane %v1160, 4
        %v1162 = vsel %vm222, 0, %v1161
        %v1164 = vunpack.c.l.s4 1934713408
        %v1165 = vunpack.c.0.s8 %v1164
        %v1166 = vperm.slane %v1156, %v1165
        %v1169 = vpack.i.b16 %v1110, %v1084
        %v1170 = vshrl.u32 %v1084, 16
        %v1171 = vshrl.u32 %v1110, 16
        %v1172 = vpack.i.b16 %v1171, %v1170
        %v1175 = vpack.i.b16 %v1116, %v1090
        %v1176 = vshrl.u32 %v1090, 16
        %v1177 = vshrl.u32 %v1116, 16
        %v1178 = vpack.i.b16 %v1177, %v1176
        %v1181 = vpack.i.b16 %v1114, %v1088
        %v1182 = vshrl.u32 %v1088, 16
        %v1183 = vshrl.u32 %v1114, 16
        %v1184 = vpack.i.b16 %v1183, %v1182
        %v1187 = vpack.i.b16 %v1118, %v1092
        %v1188 = vshrl.u32 %v1092, 16
        %v1189 = vshrl.u32 %v1118, 16
        %v1190 = vpack.i.b16 %v1189, %v1188
        %v1193 = vpack.i.b16 %v1160, %v1136
        %v1194 = vshrl.u32 %v1136, 16
        %v1195 = vshrl.u32 %v1160, 16
        %v1196 = vpack.i.b16 %v1195, %v1194
        %v1199 = vpack.i.b16 %v1162, %v1138
        %v1200 = vshrl.u32 %v1138, 16
        %v1201 = vshrl.u32 %v1162, 16
        %v1202 = vpack.i.b16 %v1201, %v1200
        %v1205 = vpack.i.b16 %v1166, %v1142
        %v1206 = vshrl.u32 %v1142, 16
        %v1207 = vshrl.u32 %v1166, 16
        %v1208 = vpack.i.b16 %v1207, %v1206
        %v1209 = vunpack.c.l.b16 %v1172
        %v1210 = vpack.c.b16 %v1209, %v1209
        %1211 = vrot.lane.b32.xlu0 %v1210, 14
        %v1212 = vpop.permute.xlu0 %1211
        %v1213 = vunpack.c.l.b16 %v1175
        %v1214 = vpack.c.b16 %v1213, %v1213
        %1215 = vrot.lane.b32.xlu0 %v1214, 28
        %v1216 = vpop.permute.xlu0 %1215
        %v1217 = vunpack.c.l.b16 %v1178
        %v1218 = vpack.c.b16 %v1217, %v1217
        %1219 = vrot.lane.b32.xlu0 %v1218, 42
        %v1220 = vpop.permute.xlu0 %1219
        %v1221 = vunpack.c.l.b16 %v1181
        %v1222 = vpack.c.b16 %v1221, %v1221
        %1223 = vrot.lane.b32.xlu0 %v1222, 56
        %v1224 = vpop.permute.xlu0 %1223
        %v1225 = vunpack.c.l.b16 %v1184
        %v1226 = vpack.c.b16 %v1225, %v1225
        %1227 = vrot.lane.b32.xlu0 %v1226, 70
        %v1228 = vpop.permute.xlu0 %1227
        %v1229 = vunpack.c.l.b16 %v1187
        %v1230 = vpack.c.b16 %v1229, %v1229
        %1231 = vrot.lane.b32.xlu0 %v1230, 84
        %v1232 = vpop.permute.xlu0 %1231
        %v1233 = vunpack.c.l.b16 %v1190
        %v1234 = vpack.c.b16 %v1233, %v1233
        %1235 = vrot.lane.b32.xlu0 %v1234, 98
        %v1236 = vpop.permute.xlu0 %1235
        %v1237 = vunpack.c.l.b16 %v1193
        %v1238 = vpack.c.b16 %v1237, %v1237
        %1239 = vrot.lane.b32.xlu0 %v1238, 112
        %v1240 = vpop.permute.xlu0 %1239
        %v1241 = vunpack.c.l.b16 %v1196
        %v1242 = vpack.c.b16 %v1241, %v1241
        %1243 = vrot.lane.b32.xlu0 %v1242, 126
        %v1244 = vpop.permute.xlu0 %1243
        %v1245 = vunpack.c.l.b16 %v1199
        %v1246 = vpack.c.b16 %v1245, %v1245
        %1247 = vrot.lane.b32.xlu0 %v1246, 12
        %v1248 = vpop.permute.xlu0 %1247
        %v1249 = vunpack.c.l.b16 %v1202
        %v1250 = vpack.c.b16 %v1249, %v1249
        %1251 = vrot.lane.b32.xlu0 %v1250, 26
        %v1252 = vpop.permute.xlu0 %1251
        %v1253 = vunpack.c.l.b16 %v1205
        %v1254 = vpack.c.b16 %v1253, %v1253
        %1255 = vrot.lane.b32.xlu0 %v1254, 40
        %v1256 = vpop.permute.xlu0 %1255
        %v1257 = vunpack.c.l.b16 %v1208
        %v1258 = vpack.c.b16 %v1257, %v1257
        %1259 = vrot.lane.b32.xlu0 %v1258, 54
        %v1260 = vpop.permute.xlu0 %1259
        %v1263 = vsel %vm406, %v1169, %v1212
        %v1265 = vsel %vm410, %v1263, %v1216
        %v1267 = vsel %vm413, %v1265, %v1220
        %v1269 = vsel %vm416, %v1267, %v1224
        %v1271 = vsel %vm419, %v1269, %v1228
        %v1273 = vsel %vm422, %v1271, %v1232
        %v1275 = vsel %vm425, %v1273, %v1236
        %v1277 = vsel %vm428, %v1275, %v1240
        %v1279 = vsel %vm431, %v1277, %v1244
        %v1281 = vsel %vm434, %v1244, %v1248
        %v1283 = vsel %vm437, %v1281, %v1252
        %v1285 = vsel %vm440, %v1283, %v1256
        %v1287 = vsel %vm443, %v1285, %v1260
        %v1290 = vunpack.c.l.b16 %v1279
        %v1291 = vunpack.c.l.b16 %v1287
        %v1292 = vpack.c.b16 %v1291, %v1290
        %v1293 = vrot.slane %v1292, 6
        %1295 = vst.msk [vmem:[#allocation3 + $0x8] sm:$0xcc] %vm718, %v1293
        %v1296 = vld [vmem:[#allocation2] sm:$0xf]
        %v1297 = vld [vmem:[#allocation2 + $0x4] sm:$0xf]
        %v1298 = vld [vmem:[#allocation2 + $0x8] sm:$0xf]
        %v1299 = vld [vmem:[#allocation2 + $0xc] sm:$0xf]
        %v1300 = vld [vmem:[#allocation2 + $0x10] sm:$0xf]
        %v1301 = vld [vmem:[#allocation2 + $0x14] sm:$0xf]
        %v1302 = vld [vmem:[#allocation2 + $0x18] sm:$0xf]
        %v1303 = vld [vmem:[#allocation2 + $0x1c] sm:$0xf]
        %v1305 = vshrl.u32 %v1296, 16
        %v1307 = vrot.slane %v1305, 4
        %v1308 = vshll.u32 %v1296, 16
        %v1310 = vrot.slane %v1308, 5
        %v1311 = vor.u32 %v1307, %v1310
        %v1312 = vrot.slane %v1311, 4
        %v1314 = vshll.u32 %v1297, 16
        %v1316 = vrot.slane %v1314, 5
        %v1317 = vsel %vm990, %v1312, %v1316
        %v1318 = vshrl.u32 %v1297, 16
        %v1320 = vrot.slane %v1318, 4
        %v1321 = vor.u32 %v1320, %v1316
        %v1322 = vrot.slane %v1321, 4
        %v1324 = vshrl.u32 %v1298, 16
        %v1326 = vrot.slane %v1324, 4
        %v1327 = vshll.u32 %v1298, 16
        %v1329 = vrot.slane %v1327, 5
        %v1330 = vor.u32 %v1326, %v1329
        %v1331 = vrot.slane %v1330, 4
        %v1333 = vshll.u32 %v1299, 16
        %v1335 = vrot.slane %v1333, 5
        %v1336 = vsel %vm990, %v1331, %v1335
        %v1337 = vshrl.u32 %v1299, 16
        %v1339 = vrot.slane %v1337, 4
        %v1340 = vor.u32 %v1339, %v1335
        %v1341 = vrot.slane %v1340, 4
        %v1343 = vshrl.u32 %v1300, 16
        %v1345 = vrot.slane %v1343, 4
        %v1346 = vshll.u32 %v1300, 16
        %v1348 = vrot.slane %v1346, 5
        %v1349 = vor.u32 %v1345, %v1348
        %v1350 = vrot.slane %v1349, 4
        %v1352 = vshll.u32 %v1301, 16
        %v1354 = vrot.slane %v1352, 5
        %v1355 = vsel %vm990, %v1350, %v1354
        %v1356 = vshrl.u32 %v1301, 16
        %v1358 = vrot.slane %v1356, 4
        %v1359 = vor.u32 %v1358, %v1354
        %v1360 = vrot.slane %v1359, 4
        %v1362 = vshrl.u32 %v1302, 16
        %v1364 = vrot.slane %v1362, 4
        %v1365 = vshll.u32 %v1302, 16
        %v1367 = vrot.slane %v1365, 5
        %v1368 = vor.u32 %v1364, %v1367
        %v1369 = vrot.slane %v1368, 4
        %v1371 = vshll.u32 %v1303, 16
        %v1373 = vrot.slane %v1371, 5
        %v1374 = vsel %vm990, %v1369, %v1373
        %v1375 = vshrl.u32 %v1303, 16
        %v1377 = vrot.slane %v1375, 4
        %v1378 = vor.u32 %v1377, %v1373
        %v1379 = vrot.slane %v1378, 4
        %1380 = vrot.lane.b32.xlu0 %v1317, 127
        %v1381 = vpop.permute.xlu0 %1380
        %1382 = vrot.lane.b32.xlu0 %v1322, 127
        %v1383 = vpop.permute.xlu0 %1382
        %1384 = vrot.lane.b32.xlu0 %v1336, 127
        %v1385 = vpop.permute.xlu0 %1384
        %1386 = vrot.lane.b32.xlu0 %v1341, 127
        %v1387 = vpop.permute.xlu0 %1386
        %1388 = vrot.lane.b32.xlu0 %v1355, 127
        %v1389 = vpop.permute.xlu0 %1388
        %1390 = vrot.lane.b32.xlu0 %v1360, 127
        %v1391 = vpop.permute.xlu0 %1390
        %1392 = vrot.lane.b32.xlu0 %v1374, 127
        %v1393 = vpop.permute.xlu0 %1392
        %1394 = vrot.lane.b32.xlu0 %v1379, 127
        %v1395 = vpop.permute.xlu0 %1394
        %v1398 = vunpack.c.l.s4 1983009808
        %v1399 = vunpack.c.0.s8 %v1398
        %v1400 = vperm.slane %v1381, %v1399
        %v1403 = vunpack.c.l.s4 1983009808
        %v1404 = vunpack.c.0.s8 %v1403
        %v1405 = vperm.slane %v1389, %v1404
        %v1406 = vrot.slane %v1405, 4
        %v1407 = vsel %vm222, %v1406, %v1400
        %v1408 = vrot.slane %v1400, 4
        %v1409 = vsel %vm222, %v1405, %v1408
        %v1411 = vunpack.c.l.s4 1934713408
        %v1412 = vunpack.c.0.s8 %v1411
        %v1413 = vperm.slane %v1407, %v1412
        %v1415 = vunpack.c.l.s4 1934713408
        %v1416 = vunpack.c.0.s8 %v1415
        %v1417 = vperm.slane %v1409, %v1416
        %v1418 = vrot.slane %v1413, 4
        %v1419 = vsel %vm222, 0, %v1418
        %v1420 = vrot.slane %v1417, 4
        %v1421 = vsel %vm222, 0, %v1420
        %v1424 = vunpack.c.l.s4 1983009808
        %v1425 = vunpack.c.0.s8 %v1424
        %v1426 = vperm.slane %v1385, %v1425
        %v1429 = vunpack.c.l.s4 1983009808
        %v1430 = vunpack.c.0.s8 %v1429
        %v1431 = vperm.slane %v1393, %v1430
        %v1432 = vrot.slane %v1431, 4
        %v1433 = vsel %vm222, %v1432, %v1426
        %v1434 = vrot.slane %v1426, 4
        %v1435 = vsel %vm222, %v1431, %v1434
        %v1437 = vunpack.c.l.s4 1934713408
        %v1438 = vunpack.c.0.s8 %v1437
        %v1439 = vperm.slane %v1433, %v1438
        %v1441 = vunpack.c.l.s4 1934713408
        %v1442 = vunpack.c.0.s8 %v1441
        %v1443 = vperm.slane %v1435, %v1442
        %v1444 = vrot.slane %v1439, 4
        %v1445 = vsel %vm222, 0, %v1444
        %v1446 = vrot.slane %v1443, 4
        %v1447 = vsel %vm222, 0, %v1446
        %v1450 = vunpack.c.l.s4 1983009808
        %v1451 = vunpack.c.0.s8 %v1450
        %v1452 = vperm.slane %v1383, %v1451
        %v1455 = vunpack.c.l.s4 1983009808
        %v1456 = vunpack.c.0.s8 %v1455
        %v1457 = vperm.slane %v1391, %v1456
        %v1458 = vrot.slane %v1457, 4
        %v1459 = vsel %vm222, %v1458, %v1452
        %v1460 = vrot.slane %v1452, 4
        %v1461 = vsel %vm222, %v1457, %v1460
        %v1463 = vunpack.c.l.s4 1934713408
        %v1464 = vunpack.c.0.s8 %v1463
        %v1465 = vperm.slane %v1459, %v1464
        %v1466 = vrot.slane %v1465, 4
        %v1467 = vsel %vm222, 0, %v1466
        %v1469 = vunpack.c.l.s4 1934713408
        %v1470 = vunpack.c.0.s8 %v1469
        %v1471 = vperm.slane %v1461, %v1470
        %v1474 = vunpack.c.l.s4 1983009808
        %v1475 = vunpack.c.0.s8 %v1474
        %v1476 = vperm.slane %v1387, %v1475
        %v1479 = vunpack.c.l.s4 1983009808
        %v1480 = vunpack.c.0.s8 %v1479
        %v1481 = vperm.slane %v1395, %v1480
        %v1482 = vrot.slane %v1481, 4
        %v1483 = vsel %vm222, %v1482, %v1476
        %v1484 = vrot.slane %v1476, 4
        %v1485 = vsel %vm222, %v1481, %v1484
        %v1487 = vunpack.c.l.s4 1934713408
        %v1488 = vunpack.c.0.s8 %v1487
        %v1489 = vperm.slane %v1483, %v1488
        %v1490 = vrot.slane %v1489, 4
        %v1491 = vsel %vm222, 0, %v1490
        %v1493 = vunpack.c.l.s4 1934713408
        %v1494 = vunpack.c.0.s8 %v1493
        %v1495 = vperm.slane %v1485, %v1494
        %v1498 = vpack.i.b16 %v1439, %v1413
        %v1499 = vshrl.u32 %v1413, 16
        %v1500 = vshrl.u32 %v1439, 16
        %v1501 = vpack.i.b16 %v1500, %v1499
        %v1504 = vpack.i.b16 %v1445, %v1419
        %v1505 = vshrl.u32 %v1419, 16
        %v1506 = vshrl.u32 %v1445, 16
        %v1507 = vpack.i.b16 %v1506, %v1505
        %v1510 = vpack.i.b16 %v1443, %v1417
        %v1511 = vshrl.u32 %v1417, 16
        %v1512 = vshrl.u32 %v1443, 16
        %v1513 = vpack.i.b16 %v1512, %v1511
        %v1516 = vpack.i.b16 %v1447, %v1421
        %v1517 = vshrl.u32 %v1421, 16
        %v1518 = vshrl.u32 %v1447, 16
        %v1519 = vpack.i.b16 %v1518, %v1517
        %v1522 = vpack.i.b16 %v1489, %v1465
        %v1523 = vshrl.u32 %v1465, 16
        %v1524 = vshrl.u32 %v1489, 16
        %v1525 = vpack.i.b16 %v1524, %v1523
        %v1528 = vpack.i.b16 %v1491, %v1467
        %v1529 = vshrl.u32 %v1467, 16
        %v1530 = vshrl.u32 %v1491, 16
        %v1531 = vpack.i.b16 %v1530, %v1529
        %v1534 = vpack.i.b16 %v1495, %v1471
        %v1535 = vshrl.u32 %v1471, 16
        %v1536 = vshrl.u32 %v1495, 16
        %v1537 = vpack.i.b16 %v1536, %v1535
        %v1538 = vunpack.c.l.b16 %v1501
        %v1539 = vpack.c.b16 %v1538, %v1538
        %1540 = vrot.lane.b32.xlu0 %v1539, 14
        %v1541 = vpop.permute.xlu0 %1540
        %v1542 = vunpack.c.l.b16 %v1504
        %v1543 = vpack.c.b16 %v1542, %v1542
        %1544 = vrot.lane.b32.xlu0 %v1543, 28
        %v1545 = vpop.permute.xlu0 %1544
        %v1546 = vunpack.c.l.b16 %v1507
        %v1547 = vpack.c.b16 %v1546, %v1546
        %1548 = vrot.lane.b32.xlu0 %v1547, 42
        %v1549 = vpop.permute.xlu0 %1548
        %v1550 = vunpack.c.l.b16 %v1510
        %v1551 = vpack.c.b16 %v1550, %v1550
        %1552 = vrot.lane.b32.xlu0 %v1551, 56
        %v1553 = vpop.permute.xlu0 %1552
        %v1554 = vunpack.c.l.b16 %v1513
        %v1555 = vpack.c.b16 %v1554, %v1554
        %1556 = vrot.lane.b32.xlu0 %v1555, 70
        %v1557 = vpop.permute.xlu0 %1556
        %v1558 = vunpack.c.l.b16 %v1516
        %v1559 = vpack.c.b16 %v1558, %v1558
        %1560 = vrot.lane.b32.xlu0 %v1559, 84
        %v1561 = vpop.permute.xlu0 %1560
        %v1562 = vunpack.c.l.b16 %v1519
        %v1563 = vpack.c.b16 %v1562, %v1562
        %1564 = vrot.lane.b32.xlu0 %v1563, 98
        %v1565 = vpop.permute.xlu0 %1564
        %v1566 = vunpack.c.l.b16 %v1522
        %v1567 = vpack.c.b16 %v1566, %v1566
        %1568 = vrot.lane.b32.xlu0 %v1567, 112
        %v1569 = vpop.permute.xlu0 %1568
        %v1570 = vunpack.c.l.b16 %v1525
        %v1571 = vpack.c.b16 %v1570, %v1570
        %1572 = vrot.lane.b32.xlu0 %v1571, 126
        %v1573 = vpop.permute.xlu0 %1572
        %v1574 = vunpack.c.l.b16 %v1528
        %v1575 = vpack.c.b16 %v1574, %v1574
        %1576 = vrot.lane.b32.xlu0 %v1575, 12
        %v1577 = vpop.permute.xlu0 %1576
        %v1578 = vunpack.c.l.b16 %v1531
        %v1579 = vpack.c.b16 %v1578, %v1578
        %1580 = vrot.lane.b32.xlu0 %v1579, 26
        %v1581 = vpop.permute.xlu0 %1580
        %v1582 = vunpack.c.l.b16 %v1534
        %v1583 = vpack.c.b16 %v1582, %v1582
        %1584 = vrot.lane.b32.xlu0 %v1583, 40
        %v1585 = vpop.permute.xlu0 %1584
        %v1586 = vunpack.c.l.b16 %v1537
        %v1587 = vpack.c.b16 %v1586, %v1586
        %1588 = vrot.lane.b32.xlu0 %v1587, 54
        %v1589 = vpop.permute.xlu0 %1588
        %v1592 = vsel %vm406, %v1498, %v1541
        %v1594 = vsel %vm410, %v1592, %v1545
        %v1596 = vsel %vm413, %v1594, %v1549
        %v1598 = vsel %vm416, %v1596, %v1553
        %v1600 = vsel %vm419, %v1598, %v1557
        %v1602 = vsel %vm422, %v1600, %v1561
        %v1604 = vsel %vm425, %v1602, %v1565
        %v1606 = vsel %vm428, %v1604, %v1569
        %v1608 = vsel %vm431, %v1606, %v1573
        %v1610 = vsel %vm434, %v1573, %v1577
        %v1612 = vsel %vm437, %v1610, %v1581
        %v1614 = vsel %vm440, %v1612, %v1585
        %v1616 = vsel %vm443, %v1614, %v1589
        %v1619 = vunpack.c.l.b16 %v1608
        %v1620 = vunpack.c.l.b16 %v1616
        %v1621 = vpack.c.b16 %v1620, %v1619
        %1623 = vst.msk [vmem:[#allocation3 + $0x10] sm:$0x33] %vm454, %v1621
        %v1624 = vld [vmem:[#allocation2] sm:$0xf]
        %v1625 = vld [vmem:[#allocation2 + $0x4] sm:$0xf]
        %v1626 = vld [vmem:[#allocation2 + $0x8] sm:$0xf]
        %v1627 = vld [vmem:[#allocation2 + $0xc] sm:$0xf]
        %v1628 = vld [vmem:[#allocation2 + $0x10] sm:$0xf]
        %v1629 = vld [vmem:[#allocation2 + $0x14] sm:$0xf]
        %v1630 = vld [vmem:[#allocation2 + $0x18] sm:$0xf]
        %v1631 = vld [vmem:[#allocation2 + $0x1c] sm:$0xf]
        %v1633 = vshrl.u32 %v1624, 16
        %v1635 = vrot.slane %v1633, 4
        %v1636 = vshll.u32 %v1624, 16
        %v1638 = vrot.slane %v1636, 5
        %v1639 = vor.u32 %v1635, %v1638
        %v1640 = vrot.slane %v1639, 4
        %v1642 = vshll.u32 %v1625, 16
        %v1644 = vrot.slane %v1642, 5
        %v1645 = vsel %vm990, %v1640, %v1644
        %v1646 = vshrl.u32 %v1625, 16
        %v1648 = vrot.slane %v1646, 4
        %v1649 = vor.u32 %v1648, %v1644
        %v1650 = vrot.slane %v1649, 4
        %v1652 = vshrl.u32 %v1626, 16
        %v1654 = vrot.slane %v1652, 4
        %v1655 = vshll.u32 %v1626, 16
        %v1657 = vrot.slane %v1655, 5
        %v1658 = vor.u32 %v1654, %v1657
        %v1659 = vrot.slane %v1658, 4
        %v1661 = vshll.u32 %v1627, 16
        %v1663 = vrot.slane %v1661, 5
        %v1664 = vsel %vm990, %v1659, %v1663
        %v1665 = vshrl.u32 %v1627, 16
        %v1667 = vrot.slane %v1665, 4
        %v1668 = vor.u32 %v1667, %v1663
        %v1669 = vrot.slane %v1668, 4
        %v1671 = vshrl.u32 %v1628, 16
        %v1673 = vrot.slane %v1671, 4
        %v1674 = vshll.u32 %v1628, 16
        %v1676 = vrot.slane %v1674, 5
        %v1677 = vor.u32 %v1673, %v1676
        %v1678 = vrot.slane %v1677, 4
        %v1680 = vshll.u32 %v1629, 16
        %v1682 = vrot.slane %v1680, 5
        %v1683 = vsel %vm990, %v1678, %v1682
        %v1684 = vshrl.u32 %v1629, 16
        %v1686 = vrot.slane %v1684, 4
        %v1687 = vor.u32 %v1686, %v1682
        %v1688 = vrot.slane %v1687, 4
        %v1690 = vshrl.u32 %v1630, 16
        %v1692 = vrot.slane %v1690, 4
        %v1693 = vshll.u32 %v1630, 16
        %v1695 = vrot.slane %v1693, 5
        %v1696 = vor.u32 %v1692, %v1695
        %v1697 = vrot.slane %v1696, 4
        %v1699 = vshll.u32 %v1631, 16
        %v1701 = vrot.slane %v1699, 5
        %v1702 = vsel %vm990, %v1697, %v1701
        %v1703 = vshrl.u32 %v1631, 16
        %v1705 = vrot.slane %v1703, 4
        %v1706 = vor.u32 %v1705, %v1701
        %v1707 = vrot.slane %v1706, 4
        %1708 = vrot.lane.b32.xlu0 %v1645, 126
        %v1709 = vpop.permute.xlu0 %1708
        %1710 = vrot.lane.b32.xlu0 %v1650, 126
        %v1711 = vpop.permute.xlu0 %1710
        %1712 = vrot.lane.b32.xlu0 %v1664, 126
        %v1713 = vpop.permute.xlu0 %1712
        %1714 = vrot.lane.b32.xlu0 %v1669, 126
        %v1715 = vpop.permute.xlu0 %1714
        %1716 = vrot.lane.b32.xlu0 %v1683, 126
        %v1717 = vpop.permute.xlu0 %1716
        %1718 = vrot.lane.b32.xlu0 %v1688, 126
        %v1719 = vpop.permute.xlu0 %1718
        %1720 = vrot.lane.b32.xlu0 %v1702, 126
        %v1721 = vpop.permute.xlu0 %1720
        %1722 = vrot.lane.b32.xlu0 %v1707, 126
        %v1723 = vpop.permute.xlu0 %1722
        %v1726 = vunpack.c.l.s4 1983009808
        %v1727 = vunpack.c.0.s8 %v1726
        %v1728 = vperm.slane %v1709, %v1727
        %v1731 = vunpack.c.l.s4 1983009808
        %v1732 = vunpack.c.0.s8 %v1731
        %v1733 = vperm.slane %v1717, %v1732
        %v1734 = vrot.slane %v1733, 4
        %v1735 = vsel %vm222, %v1734, %v1728
        %v1736 = vrot.slane %v1728, 4
        %v1737 = vsel %vm222, %v1733, %v1736
        %v1739 = vunpack.c.l.s4 1934713408
        %v1740 = vunpack.c.0.s8 %v1739
        %v1741 = vperm.slane %v1735, %v1740
        %v1743 = vunpack.c.l.s4 1934713408
        %v1744 = vunpack.c.0.s8 %v1743
        %v1745 = vperm.slane %v1737, %v1744
        %v1746 = vrot.slane %v1741, 4
        %v1747 = vsel %vm222, 0, %v1746
        %v1748 = vrot.slane %v1745, 4
        %v1749 = vsel %vm222, 0, %v1748
        %v1752 = vunpack.c.l.s4 1983009808
        %v1753 = vunpack.c.0.s8 %v1752
        %v1754 = vperm.slane %v1713, %v1753
        %v1757 = vunpack.c.l.s4 1983009808
        %v1758 = vunpack.c.0.s8 %v1757
        %v1759 = vperm.slane %v1721, %v1758
        %v1760 = vrot.slane %v1759, 4
        %v1761 = vsel %vm222, %v1760, %v1754
        %v1762 = vrot.slane %v1754, 4
        %v1763 = vsel %vm222, %v1759, %v1762
        %v1765 = vunpack.c.l.s4 1934713408
        %v1766 = vunpack.c.0.s8 %v1765
        %v1767 = vperm.slane %v1761, %v1766
        %v1769 = vunpack.c.l.s4 1934713408
        %v1770 = vunpack.c.0.s8 %v1769
        %v1771 = vperm.slane %v1763, %v1770
        %v1772 = vrot.slane %v1767, 4
        %v1773 = vsel %vm222, 0, %v1772
        %v1774 = vrot.slane %v1771, 4
        %v1775 = vsel %vm222, 0, %v1774
        %v1778 = vunpack.c.l.s4 1983009808
        %v1779 = vunpack.c.0.s8 %v1778
        %v1780 = vperm.slane %v1711, %v1779
        %v1783 = vunpack.c.l.s4 1983009808
        %v1784 = vunpack.c.0.s8 %v1783
        %v1785 = vperm.slane %v1719, %v1784
        %v1786 = vrot.slane %v1785, 4
        %v1787 = vsel %vm222, %v1786, %v1780
        %v1788 = vrot.slane %v1780, 4
        %v1789 = vsel %vm222, %v1785, %v1788
        %v1791 = vunpack.c.l.s4 1934713408
        %v1792 = vunpack.c.0.s8 %v1791
        %v1793 = vperm.slane %v1787, %v1792
        %v1794 = vrot.slane %v1793, 4
        %v1795 = vsel %vm222, 0, %v1794
        %v1797 = vunpack.c.l.s4 1934713408
        %v1798 = vunpack.c.0.s8 %v1797
        %v1799 = vperm.slane %v1789, %v1798
        %v1802 = vunpack.c.l.s4 1983009808
        %v1803 = vunpack.c.0.s8 %v1802
        %v1804 = vperm.slane %v1715, %v1803
        %v1807 = vunpack.c.l.s4 1983009808
        %v1808 = vunpack.c.0.s8 %v1807
        %v1809 = vperm.slane %v1723, %v1808
        %v1810 = vrot.slane %v1809, 4
        %v1811 = vsel %vm222, %v1810, %v1804
        %v1812 = vrot.slane %v1804, 4
        %v1813 = vsel %vm222, %v1809, %v1812
        %v1815 = vunpack.c.l.s4 1934713408
        %v1816 = vunpack.c.0.s8 %v1815
        %v1817 = vperm.slane %v1811, %v1816
        %v1818 = vrot.slane %v1817, 4
        %v1819 = vsel %vm222, 0, %v1818
        %v1821 = vunpack.c.l.s4 1934713408
        %v1822 = vunpack.c.0.s8 %v1821
        %v1823 = vperm.slane %v1813, %v1822
        %v1826 = vpack.i.b16 %v1767, %v1741
        %v1827 = vshrl.u32 %v1741, 16
        %v1828 = vshrl.u32 %v1767, 16
        %v1829 = vpack.i.b16 %v1828, %v1827
        %v1832 = vpack.i.b16 %v1773, %v1747
        %v1833 = vshrl.u32 %v1747, 16
        %v1834 = vshrl.u32 %v1773, 16
        %v1835 = vpack.i.b16 %v1834, %v1833
        %v1838 = vpack.i.b16 %v1771, %v1745
        %v1839 = vshrl.u32 %v1745, 16
        %v1840 = vshrl.u32 %v1771, 16
        %v1841 = vpack.i.b16 %v1840, %v1839
        %v1844 = vpack.i.b16 %v1775, %v1749
        %v1845 = vshrl.u32 %v1749, 16
        %v1846 = vshrl.u32 %v1775, 16
        %v1847 = vpack.i.b16 %v1846, %v1845
        %v1850 = vpack.i.b16 %v1817, %v1793
        %v1851 = vshrl.u32 %v1793, 16
        %v1852 = vshrl.u32 %v1817, 16
        %v1853 = vpack.i.b16 %v1852, %v1851
        %v1856 = vpack.i.b16 %v1819, %v1795
        %v1857 = vshrl.u32 %v1795, 16
        %v1858 = vshrl.u32 %v1819, 16
        %v1859 = vpack.i.b16 %v1858, %v1857
        %v1862 = vpack.i.b16 %v1823, %v1799
        %v1863 = vshrl.u32 %v1799, 16
        %v1864 = vshrl.u32 %v1823, 16
        %v1865 = vpack.i.b16 %v1864, %v1863
        %v1866 = vunpack.c.l.b16 %v1829
        %v1867 = vpack.c.b16 %v1866, %v1866
        %1868 = vrot.lane.b32.xlu0 %v1867, 14
        %v1869 = vpop.permute.xlu0 %1868
        %v1870 = vunpack.c.l.b16 %v1832
        %v1871 = vpack.c.b16 %v1870, %v1870
        %1872 = vrot.lane.b32.xlu0 %v1871, 28
        %v1873 = vpop.permute.xlu0 %1872
        %v1874 = vunpack.c.l.b16 %v1835
        %v1875 = vpack.c.b16 %v1874, %v1874
        %1876 = vrot.lane.b32.xlu0 %v1875, 42
        %v1877 = vpop.permute.xlu0 %1876
        %v1878 = vunpack.c.l.b16 %v1838
        %v1879 = vpack.c.b16 %v1878, %v1878
        %1880 = vrot.lane.b32.xlu0 %v1879, 56
        %v1881 = vpop.permute.xlu0 %1880
        %v1882 = vunpack.c.l.b16 %v1841
        %v1883 = vpack.c.b16 %v1882, %v1882
        %1884 = vrot.lane.b32.xlu0 %v1883, 70
        %v1885 = vpop.permute.xlu0 %1884
        %v1886 = vunpack.c.l.b16 %v1844
        %v1887 = vpack.c.b16 %v1886, %v1886
        %1888 = vrot.lane.b32.xlu0 %v1887, 84
        %v1889 = vpop.permute.xlu0 %1888
        %v1890 = vunpack.c.l.b16 %v1847
        %v1891 = vpack.c.b16 %v1890, %v1890
        %1892 = vrot.lane.b32.xlu0 %v1891, 98
        %v1893 = vpop.permute.xlu0 %1892
        %v1894 = vunpack.c.l.b16 %v1850
        %v1895 = vpack.c.b16 %v1894, %v1894
        %1896 = vrot.lane.b32.xlu0 %v1895, 112
        %v1897 = vpop.permute.xlu0 %1896
        %v1898 = vunpack.c.l.b16 %v1853
        %v1899 = vpack.c.b16 %v1898, %v1898
        %1900 = vrot.lane.b32.xlu0 %v1899, 126
        %v1901 = vpop.permute.xlu0 %1900
        %v1902 = vunpack.c.l.b16 %v1856
        %v1903 = vpack.c.b16 %v1902, %v1902
        %1904 = vrot.lane.b32.xlu0 %v1903, 12
        %v1905 = vpop.permute.xlu0 %1904
        %v1906 = vunpack.c.l.b16 %v1859
        %v1907 = vpack.c.b16 %v1906, %v1906
        %1908 = vrot.lane.b32.xlu0 %v1907, 26
        %v1909 = vpop.permute.xlu0 %1908
        %v1910 = vunpack.c.l.b16 %v1862
        %v1911 = vpack.c.b16 %v1910, %v1910
        %1912 = vrot.lane.b32.xlu0 %v1911, 40
        %v1913 = vpop.permute.xlu0 %1912
        %v1914 = vunpack.c.l.b16 %v1865
        %v1915 = vpack.c.b16 %v1914, %v1914
        %1916 = vrot.lane.b32.xlu0 %v1915, 54
        %v1917 = vpop.permute.xlu0 %1916
        %v1920 = vsel %vm406, %v1826, %v1869
        %v1922 = vsel %vm410, %v1920, %v1873
        %v1924 = vsel %vm413, %v1922, %v1877
        %v1926 = vsel %vm416, %v1924, %v1881
        %v1928 = vsel %vm419, %v1926, %v1885
        %v1930 = vsel %vm422, %v1928, %v1889
        %v1932 = vsel %vm425, %v1930, %v1893
        %v1934 = vsel %vm428, %v1932, %v1897
        %v1936 = vsel %vm431, %v1934, %v1901
        %v1938 = vsel %vm434, %v1901, %v1905
        %v1940 = vsel %vm437, %v1938, %v1909
        %v1942 = vsel %vm440, %v1940, %v1913
        %v1944 = vsel %vm443, %v1942, %v1917
        %v1947 = vunpack.c.l.b16 %v1936
        %v1948 = vunpack.c.l.b16 %v1944
        %v1949 = vpack.c.b16 %v1948, %v1947
        %v1950 = vrot.slane %v1949, 6
        %1952 = vst.msk [vmem:[#allocation3 + $0x10] sm:$0xcc] %vm718, %v1950
        %v1953 = vld [vmem:[#allocation2] sm:$0xe]
        %v1954 = vld [vmem:[#allocation2 + $0x4] sm:$0xf]
        %v1955 = vld [vmem:[#allocation2 + $0x8] sm:$0xe]
        %v1956 = vld [vmem:[#allocation2 + $0xc] sm:$0xf]
        %v1957 = vld [vmem:[#allocation2 + $0x10] sm:$0xe]
        %v1958 = vld [vmem:[#allocation2 + $0x14] sm:$0xf]
        %v1959 = vld [vmem:[#allocation2 + $0x18] sm:$0xe]
        %v1960 = vld [vmem:[#allocation2 + $0x1c] sm:$0xf]
        %vm1969 = vcmask 1042432
        %vm1970 = vcmask 1046532
        %vm1971 = vmor %vm1969, %vm1970
        %v1972 = vrot.slane %v1953, 5
        %v1973 = vrot.slane %v1972, 4
        %v1974 = vrot.slane %v1954, 5
        %v1975 = vsel %vm1971, %v1973, %v1974
        %v1976 = vrot.slane %v1974, 4
        %v1977 = vrot.slane %v1955, 5
        %v1978 = vrot.slane %v1977, 4
        %v1979 = vrot.slane %v1956, 5
        %v1980 = vsel %vm1971, %v1978, %v1979
        %v1981 = vrot.slane %v1979, 4
        %v1982 = vrot.slane %v1957, 5
        %v1983 = vrot.slane %v1982, 4
        %v1984 = vrot.slane %v1958, 5
        %v1985 = vsel %vm1971, %v1983, %v1984
        %v1986 = vrot.slane %v1984, 4
        %v1987 = vrot.slane %v1959, 5
        %v1988 = vrot.slane %v1987, 4
        %v1989 = vrot.slane %v1960, 5
        %v1990 = vsel %vm1971, %v1988, %v1989
        %v1991 = vrot.slane %v1989, 4
        %v1994 = vunpack.c.l.s4 1983009808
        %v1995 = vunpack.c.0.s8 %v1994
        %v1996 = vperm.slane %v1975, %v1995
        %v1999 = vunpack.c.l.s4 1983009808
        %v2000 = vunpack.c.0.s8 %v1999
        %v2001 = vperm.slane %v1985, %v2000
        %v2002 = vrot.slane %v2001, 4
        %v2003 = vsel %vm222, %v2002, %v1996
        %v2004 = vrot.slane %v1996, 4
        %v2005 = vsel %vm222, %v2001, %v2004
        %v2007 = vunpack.c.l.s4 1934713408
        %v2008 = vunpack.c.0.s8 %v2007
        %v2009 = vperm.slane %v2003, %v2008
        %v2011 = vunpack.c.l.s4 1934713408
        %v2012 = vunpack.c.0.s8 %v2011
        %v2013 = vperm.slane %v2005, %v2012
        %v2014 = vrot.slane %v2009, 4
        %v2015 = vsel %vm222, 0, %v2014
        %v2016 = vrot.slane %v2013, 4
        %v2017 = vsel %vm222, 0, %v2016
        %v2020 = vunpack.c.l.s4 1983009808
        %v2021 = vunpack.c.0.s8 %v2020
        %v2022 = vperm.slane %v1980, %v2021
        %v2025 = vunpack.c.l.s4 1983009808
        %v2026 = vunpack.c.0.s8 %v2025
        %v2027 = vperm.slane %v1990, %v2026
        %v2028 = vrot.slane %v2027, 4
        %v2029 = vsel %vm222, %v2028, %v2022
        %v2030 = vrot.slane %v2022, 4
        %v2031 = vsel %vm222, %v2027, %v2030
        %v2033 = vunpack.c.l.s4 1934713408
        %v2034 = vunpack.c.0.s8 %v2033
        %v2035 = vperm.slane %v2029, %v2034
        %v2037 = vunpack.c.l.s4 1934713408
        %v2038 = vunpack.c.0.s8 %v2037
        %v2039 = vperm.slane %v2031, %v2038
        %v2040 = vrot.slane %v2035, 4
        %v2041 = vsel %vm222, 0, %v2040
        %v2042 = vrot.slane %v2039, 4
        %v2043 = vsel %vm222, 0, %v2042
        %v2046 = vunpack.c.l.s4 1983009808
        %v2047 = vunpack.c.0.s8 %v2046
        %v2048 = vperm.slane %v1976, %v2047
        %v2051 = vunpack.c.l.s4 1983009808
        %v2052 = vunpack.c.0.s8 %v2051
        %v2053 = vperm.slane %v1986, %v2052
        %v2054 = vrot.slane %v2053, 4
        %v2055 = vsel %vm222, %v2054, %v2048
        %v2056 = vrot.slane %v2048, 4
        %v2057 = vsel %vm222, %v2053, %v2056
        %v2059 = vunpack.c.l.s4 1934713408
        %v2060 = vunpack.c.0.s8 %v2059
        %v2061 = vperm.slane %v2055, %v2060
        %v2062 = vrot.slane %v2061, 4
        %v2063 = vsel %vm222, 0, %v2062
        %v2065 = vunpack.c.l.s4 1934713408
        %v2066 = vunpack.c.0.s8 %v2065
        %v2067 = vperm.slane %v2057, %v2066
        %v2070 = vunpack.c.l.s4 1983009808
        %v2071 = vunpack.c.0.s8 %v2070
        %v2072 = vperm.slane %v1981, %v2071
        %v2075 = vunpack.c.l.s4 1983009808
        %v2076 = vunpack.c.0.s8 %v2075
        %v2077 = vperm.slane %v1991, %v2076
        %v2078 = vrot.slane %v2077, 4
        %v2079 = vsel %vm222, %v2078, %v2072
        %v2080 = vrot.slane %v2072, 4
        %v2081 = vsel %vm222, %v2077, %v2080
        %v2083 = vunpack.c.l.s4 1934713408
        %v2084 = vunpack.c.0.s8 %v2083
        %v2085 = vperm.slane %v2079, %v2084
        %v2086 = vrot.slane %v2085, 4
        %v2087 = vsel %vm222, 0, %v2086
        %v2089 = vunpack.c.l.s4 1934713408
        %v2090 = vunpack.c.0.s8 %v2089
        %v2091 = vperm.slane %v2081, %v2090
        %v2094 = vpack.i.b16 %v2035, %v2009
        %v2095 = vshrl.u32 %v2009, 16
        %v2096 = vshrl.u32 %v2035, 16
        %v2097 = vpack.i.b16 %v2096, %v2095
        %v2100 = vpack.i.b16 %v2041, %v2015
        %v2101 = vshrl.u32 %v2015, 16
        %v2102 = vshrl.u32 %v2041, 16
        %v2103 = vpack.i.b16 %v2102, %v2101
        %v2106 = vpack.i.b16 %v2039, %v2013
        %v2107 = vshrl.u32 %v2013, 16
        %v2108 = vshrl.u32 %v2039, 16
        %v2109 = vpack.i.b16 %v2108, %v2107
        %v2112 = vpack.i.b16 %v2043, %v2017
        %v2113 = vshrl.u32 %v2017, 16
        %v2114 = vshrl.u32 %v2043, 16
        %v2115 = vpack.i.b16 %v2114, %v2113
        %v2118 = vpack.i.b16 %v2085, %v2061
        %v2119 = vshrl.u32 %v2061, 16
        %v2120 = vshrl.u32 %v2085, 16
        %v2121 = vpack.i.b16 %v2120, %v2119
        %v2124 = vpack.i.b16 %v2087, %v2063
        %v2125 = vshrl.u32 %v2063, 16
        %v2126 = vshrl.u32 %v2087, 16
        %v2127 = vpack.i.b16 %v2126, %v2125
        %v2130 = vpack.i.b16 %v2091, %v2067
        %v2131 = vshrl.u32 %v2067, 16
        %v2132 = vshrl.u32 %v2091, 16
        %v2133 = vpack.i.b16 %v2132, %v2131
        %v2134 = vunpack.c.l.b16 %v2097
        %v2135 = vpack.c.b16 %v2134, %v2134
        %2136 = vrot.lane.b32.xlu0 %v2135, 14
        %v2137 = vpop.permute.xlu0 %2136
        %v2138 = vunpack.c.l.b16 %v2100
        %v2139 = vpack.c.b16 %v2138, %v2138
        %2140 = vrot.lane.b32.xlu0 %v2139, 28
        %v2141 = vpop.permute.xlu0 %2140
        %v2142 = vunpack.c.l.b16 %v2103
        %v2143 = vpack.c.b16 %v2142, %v2142
        %2144 = vrot.lane.b32.xlu0 %v2143, 42
        %v2145 = vpop.permute.xlu0 %2144
        %v2146 = vunpack.c.l.b16 %v2106
        %v2147 = vpack.c.b16 %v2146, %v2146
        %2148 = vrot.lane.b32.xlu0 %v2147, 56
        %v2149 = vpop.permute.xlu0 %2148
        %v2150 = vunpack.c.l.b16 %v2109
        %v2151 = vpack.c.b16 %v2150, %v2150
        %2152 = vrot.lane.b32.xlu0 %v2151, 70
        %v2153 = vpop.permute.xlu0 %2152
        %v2154 = vunpack.c.l.b16 %v2112
        %v2155 = vpack.c.b16 %v2154, %v2154
        %2156 = vrot.lane.b32.xlu0 %v2155, 84
        %v2157 = vpop.permute.xlu0 %2156
        %v2158 = vunpack.c.l.b16 %v2115
        %v2159 = vpack.c.b16 %v2158, %v2158
        %2160 = vrot.lane.b32.xlu0 %v2159, 98
        %v2161 = vpop.permute.xlu0 %2160
        %v2162 = vunpack.c.l.b16 %v2118
        %v2163 = vpack.c.b16 %v2162, %v2162
        %2164 = vrot.lane.b32.xlu0 %v2163, 112
        %v2165 = vpop.permute.xlu0 %2164
        %v2166 = vunpack.c.l.b16 %v2121
        %v2167 = vpack.c.b16 %v2166, %v2166
        %2168 = vrot.lane.b32.xlu0 %v2167, 126
        %v2169 = vpop.permute.xlu0 %2168
        %v2170 = vunpack.c.l.b16 %v2124
        %v2171 = vpack.c.b16 %v2170, %v2170
        %2172 = vrot.lane.b32.xlu0 %v2171, 12
        %v2173 = vpop.permute.xlu0 %2172
        %v2174 = vunpack.c.l.b16 %v2127
        %v2175 = vpack.c.b16 %v2174, %v2174
        %2176 = vrot.lane.b32.xlu0 %v2175, 26
        %v2177 = vpop.permute.xlu0 %2176
        %v2178 = vunpack.c.l.b16 %v2130
        %v2179 = vpack.c.b16 %v2178, %v2178
        %2180 = vrot.lane.b32.xlu0 %v2179, 40
        %v2181 = vpop.permute.xlu0 %2180
        %v2182 = vunpack.c.l.b16 %v2133
        %v2183 = vpack.c.b16 %v2182, %v2182
        %2184 = vrot.lane.b32.xlu0 %v2183, 54
        %v2185 = vpop.permute.xlu0 %2184
        %v2188 = vsel %vm406, %v2094, %v2137
        %v2190 = vsel %vm410, %v2188, %v2141
        %v2192 = vsel %vm413, %v2190, %v2145
        %v2194 = vsel %vm416, %v2192, %v2149
        %v2196 = vsel %vm419, %v2194, %v2153
        %v2198 = vsel %vm422, %v2196, %v2157
        %v2200 = vsel %vm425, %v2198, %v2161
        %v2202 = vsel %vm428, %v2200, %v2165
        %v2204 = vsel %vm431, %v2202, %v2169
        %v2206 = vsel %vm434, %v2169, %v2173
        %v2208 = vsel %vm437, %v2206, %v2177
        %v2210 = vsel %vm440, %v2208, %v2181
        %v2212 = vsel %vm443, %v2210, %v2185
        %v2215 = vunpack.c.l.b16 %v2204
        %v2216 = vunpack.c.l.b16 %v2212
        %v2217 = vpack.c.b16 %v2216, %v2215
        %2219 = vst.msk [vmem:[#allocation3 + $0x18] sm:$0x33] %vm454, %v2217
        %v2220 = vld [vmem:[#allocation2] sm:$0xe]
        %v2221 = vld [vmem:[#allocation2 + $0x4] sm:$0xf]
        %v2222 = vld [vmem:[#allocation2 + $0x8] sm:$0xe]
        %v2223 = vld [vmem:[#allocation2 + $0xc] sm:$0xf]
        %v2224 = vld [vmem:[#allocation2 + $0x10] sm:$0xe]
        %v2225 = vld [vmem:[#allocation2 + $0x14] sm:$0xf]
        %v2226 = vld [vmem:[#allocation2 + $0x18] sm:$0xe]
        %v2227 = vld [vmem:[#allocation2 + $0x1c] sm:$0xf]
        %v2236 = vrot.slane %v2220, 5
        %v2237 = vrot.slane %v2236, 4
        %v2238 = vrot.slane %v2221, 5
        %v2239 = vsel %vm1971, %v2237, %v2238
        %v2240 = vrot.slane %v2238, 4
        %v2241 = vrot.slane %v2222, 5
        %v2242 = vrot.slane %v2241, 4
        %v2243 = vrot.slane %v2223, 5
        %v2244 = vsel %vm1971, %v2242, %v2243
        %v2245 = vrot.slane %v2243, 4
        %v2246 = vrot.slane %v2224, 5
        %v2247 = vrot.slane %v2246, 4
        %v2248 = vrot.slane %v2225, 5
        %v2249 = vsel %vm1971, %v2247, %v2248
        %v2250 = vrot.slane %v2248, 4
        %v2251 = vrot.slane %v2226, 5
        %v2252 = vrot.slane %v2251, 4
        %v2253 = vrot.slane %v2227, 5
        %v2254 = vsel %vm1971, %v2252, %v2253
        %v2255 = vrot.slane %v2253, 4
        %2256 = vrot.lane.b32.xlu0 %v2239, 127
        %v2257 = vpop.permute.xlu0 %2256
        %2258 = vrot.lane.b32.xlu0 %v2240, 127
        %v2259 = vpop.permute.xlu0 %2258
        %2260 = vrot.lane.b32.xlu0 %v2244, 127
        %v2261 = vpop.permute.xlu0 %2260
        %2262 = vrot.lane.b32.xlu0 %v2245, 127
        %v2263 = vpop.permute.xlu0 %2262
        %2264 = vrot.lane.b32.xlu0 %v2249, 127
        %v2265 = vpop.permute.xlu0 %2264
        %2266 = vrot.lane.b32.xlu0 %v2250, 127
        %v2267 = vpop.permute.xlu0 %2266
        %2268 = vrot.lane.b32.xlu0 %v2254, 127
        %v2269 = vpop.permute.xlu0 %2268
        %2270 = vrot.lane.b32.xlu0 %v2255, 127
        %v2271 = vpop.permute.xlu0 %2270
        %v2274 = vunpack.c.l.s4 1983009808
        %v2275 = vunpack.c.0.s8 %v2274
        %v2276 = vperm.slane %v2257, %v2275
        %v2279 = vunpack.c.l.s4 1983009808
        %v2280 = vunpack.c.0.s8 %v2279
        %v2281 = vperm.slane %v2265, %v2280
        %v2282 = vrot.slane %v2281, 4
        %v2283 = vsel %vm222, %v2282, %v2276
        %v2284 = vrot.slane %v2276, 4
        %v2285 = vsel %vm222, %v2281, %v2284
        %v2287 = vunpack.c.l.s4 1934713408
        %v2288 = vunpack.c.0.s8 %v2287
        %v2289 = vperm.slane %v2283, %v2288
        %v2291 = vunpack.c.l.s4 1934713408
        %v2292 = vunpack.c.0.s8 %v2291
        %v2293 = vperm.slane %v2285, %v2292
        %v2294 = vrot.slane %v2289, 4
        %v2295 = vsel %vm222, 0, %v2294
        %v2296 = vrot.slane %v2293, 4
        %v2297 = vsel %vm222, 0, %v2296
        %v2300 = vunpack.c.l.s4 1983009808
        %v2301 = vunpack.c.0.s8 %v2300
        %v2302 = vperm.slane %v2261, %v2301
        %v2305 = vunpack.c.l.s4 1983009808
        %v2306 = vunpack.c.0.s8 %v2305
        %v2307 = vperm.slane %v2269, %v2306
        %v2308 = vrot.slane %v2307, 4
        %v2309 = vsel %vm222, %v2308, %v2302
        %v2310 = vrot.slane %v2302, 4
        %v2311 = vsel %vm222, %v2307, %v2310
        %v2313 = vunpack.c.l.s4 1934713408
        %v2314 = vunpack.c.0.s8 %v2313
        %v2315 = vperm.slane %v2309, %v2314
        %v2317 = vunpack.c.l.s4 1934713408
        %v2318 = vunpack.c.0.s8 %v2317
        %v2319 = vperm.slane %v2311, %v2318
        %v2320 = vrot.slane %v2315, 4
        %v2321 = vsel %vm222, 0, %v2320
        %v2322 = vrot.slane %v2319, 4
        %v2323 = vsel %vm222, 0, %v2322
        %v2326 = vunpack.c.l.s4 1983009808
        %v2327 = vunpack.c.0.s8 %v2326
        %v2328 = vperm.slane %v2259, %v2327
        %v2331 = vunpack.c.l.s4 1983009808
        %v2332 = vunpack.c.0.s8 %v2331
        %v2333 = vperm.slane %v2267, %v2332
        %v2334 = vrot.slane %v2333, 4
        %v2335 = vsel %vm222, %v2334, %v2328
        %v2336 = vrot.slane %v2328, 4
        %v2337 = vsel %vm222, %v2333, %v2336
        %v2339 = vunpack.c.l.s4 1934713408
        %v2340 = vunpack.c.0.s8 %v2339
        %v2341 = vperm.slane %v2335, %v2340
        %v2342 = vrot.slane %v2341, 4
        %v2343 = vsel %vm222, 0, %v2342
        %v2345 = vunpack.c.l.s4 1934713408
        %v2346 = vunpack.c.0.s8 %v2345
        %v2347 = vperm.slane %v2337, %v2346
        %v2350 = vunpack.c.l.s4 1983009808
        %v2351 = vunpack.c.0.s8 %v2350
        %v2352 = vperm.slane %v2263, %v2351
        %v2355 = vunpack.c.l.s4 1983009808
        %v2356 = vunpack.c.0.s8 %v2355
        %v2357 = vperm.slane %v2271, %v2356
        %v2358 = vrot.slane %v2357, 4
        %v2359 = vsel %vm222, %v2358, %v2352
        %v2360 = vrot.slane %v2352, 4
        %v2361 = vsel %vm222, %v2357, %v2360
        %v2363 = vunpack.c.l.s4 1934713408
        %v2364 = vunpack.c.0.s8 %v2363
        %v2365 = vperm.slane %v2359, %v2364
        %v2366 = vrot.slane %v2365, 4
        %v2367 = vsel %vm222, 0, %v2366
        %v2369 = vunpack.c.l.s4 1934713408
        %v2370 = vunpack.c.0.s8 %v2369
        %v2371 = vperm.slane %v2361, %v2370
        %v2374 = vpack.i.b16 %v2315, %v2289
        %v2375 = vshrl.u32 %v2289, 16
        %v2376 = vshrl.u32 %v2315, 16
        %v2377 = vpack.i.b16 %v2376, %v2375
        %v2380 = vpack.i.b16 %v2321, %v2295
        %v2381 = vshrl.u32 %v2295, 16
        %v2382 = vshrl.u32 %v2321, 16
        %v2383 = vpack.i.b16 %v2382, %v2381
        %v2386 = vpack.i.b16 %v2319, %v2293
        %v2387 = vshrl.u32 %v2293, 16
        %v2388 = vshrl.u32 %v2319, 16
        %v2389 = vpack.i.b16 %v2388, %v2387
        %v2392 = vpack.i.b16 %v2323, %v2297
        %v2393 = vshrl.u32 %v2297, 16
        %v2394 = vshrl.u32 %v2323, 16
        %v2395 = vpack.i.b16 %v2394, %v2393
        %v2398 = vpack.i.b16 %v2365, %v2341
        %v2399 = vshrl.u32 %v2341, 16
        %v2400 = vshrl.u32 %v2365, 16
        %v2401 = vpack.i.b16 %v2400, %v2399
        %v2404 = vpack.i.b16 %v2367, %v2343
        %v2405 = vshrl.u32 %v2343, 16
        %v2406 = vshrl.u32 %v2367, 16
        %v2407 = vpack.i.b16 %v2406, %v2405
        %v2410 = vpack.i.b16 %v2371, %v2347
        %v2411 = vshrl.u32 %v2347, 16
        %v2412 = vshrl.u32 %v2371, 16
        %v2413 = vpack.i.b16 %v2412, %v2411
        %v2414 = vunpack.c.l.b16 %v2377
        %v2415 = vpack.c.b16 %v2414, %v2414
        %2416 = vrot.lane.b32.xlu0 %v2415, 14
        %v2417 = vpop.permute.xlu0 %2416
        %v2418 = vunpack.c.l.b16 %v2380
        %v2419 = vpack.c.b16 %v2418, %v2418
        %2420 = vrot.lane.b32.xlu0 %v2419, 28
        %v2421 = vpop.permute.xlu0 %2420
        %v2422 = vunpack.c.l.b16 %v2383
        %v2423 = vpack.c.b16 %v2422, %v2422
        %2424 = vrot.lane.b32.xlu0 %v2423, 42
        %v2425 = vpop.permute.xlu0 %2424
        %v2426 = vunpack.c.l.b16 %v2386
        %v2427 = vpack.c.b16 %v2426, %v2426
        %2428 = vrot.lane.b32.xlu0 %v2427, 56
        %v2429 = vpop.permute.xlu0 %2428
        %v2430 = vunpack.c.l.b16 %v2389
        %v2431 = vpack.c.b16 %v2430, %v2430
        %2432 = vrot.lane.b32.xlu0 %v2431, 70
        %v2433 = vpop.permute.xlu0 %2432
        %v2434 = vunpack.c.l.b16 %v2392
        %v2435 = vpack.c.b16 %v2434, %v2434
        %2436 = vrot.lane.b32.xlu0 %v2435, 84
        %v2437 = vpop.permute.xlu0 %2436
        %v2438 = vunpack.c.l.b16 %v2395
        %v2439 = vpack.c.b16 %v2438, %v2438
        %2440 = vrot.lane.b32.xlu0 %v2439, 98
        %v2441 = vpop.permute.xlu0 %2440
        %v2442 = vunpack.c.l.b16 %v2398
        %v2443 = vpack.c.b16 %v2442, %v2442
        %2444 = vrot.lane.b32.xlu0 %v2443, 112
        %v2445 = vpop.permute.xlu0 %2444
        %v2446 = vunpack.c.l.b16 %v2401
        %v2447 = vpack.c.b16 %v2446, %v2446
        %2448 = vrot.lane.b32.xlu0 %v2447, 126
        %v2449 = vpop.permute.xlu0 %2448
        %v2450 = vunpack.c.l.b16 %v2404
        %v2451 = vpack.c.b16 %v2450, %v2450
        %2452 = vrot.lane.b32.xlu0 %v2451, 12
        %v2453 = vpop.permute.xlu0 %2452
        %v2454 = vunpack.c.l.b16 %v2407
        %v2455 = vpack.c.b16 %v2454, %v2454
        %2456 = vrot.lane.b32.xlu0 %v2455, 26
        %v2457 = vpop.permute.xlu0 %2456
        %v2458 = vunpack.c.l.b16 %v2410
        %v2459 = vpack.c.b16 %v2458, %v2458
        %2460 = vrot.lane.b32.xlu0 %v2459, 40
        %v2461 = vpop.permute.xlu0 %2460
        %v2462 = vunpack.c.l.b16 %v2413
        %v2463 = vpack.c.b16 %v2462, %v2462
        %2464 = vrot.lane.b32.xlu0 %v2463, 54
        %v2465 = vpop.permute.xlu0 %2464
        %v2468 = vsel %vm406, %v2374, %v2417
        %v2470 = vsel %vm410, %v2468, %v2421
        %v2472 = vsel %vm413, %v2470, %v2425
        %v2474 = vsel %vm416, %v2472, %v2429
        %v2476 = vsel %vm419, %v2474, %v2433
        %v2478 = vsel %vm422, %v2476, %v2437
        %v2480 = vsel %vm425, %v2478, %v2441
        %v2482 = vsel %vm428, %v2480, %v2445
        %v2484 = vsel %vm431, %v2482, %v2449
        %v2486 = vsel %vm434, %v2449, %v2453
        %v2488 = vsel %vm437, %v2486, %v2457
        %v2490 = vsel %vm440, %v2488, %v2461
        %v2492 = vsel %vm443, %v2490, %v2465
        %v2495 = vunpack.c.l.b16 %v2484
        %v2496 = vunpack.c.l.b16 %v2492
        %v2497 = vpack.c.b16 %v2496, %v2495
        %v2498 = vrot.slane %v2497, 6
        %2500 = vst.msk [vmem:[#allocation3 + $0x18] sm:$0xcc] %vm718, %v2498
        %v2501 = vld [vmem:[#allocation2] sm:$0xe]
        %v2502 = vld [vmem:[#allocation2 + $0x4] sm:$0xf]
        %v2503 = vld [vmem:[#allocation2 + $0x8] sm:$0xe]
        %v2504 = vld [vmem:[#allocation2 + $0xc] sm:$0xf]
        %v2505 = vld [vmem:[#allocation2 + $0x10] sm:$0xe]
        %v2506 = vld [vmem:[#allocation2 + $0x14] sm:$0xf]
        %v2507 = vld [vmem:[#allocation2 + $0x18] sm:$0xe]
        %v2508 = vld [vmem:[#allocation2 + $0x1c] sm:$0xf]
        %v2517 = vrot.slane %v2501, 5
        %v2518 = vrot.slane %v2517, 4
        %v2519 = vrot.slane %v2502, 5
        %v2520 = vsel %vm1971, %v2518, %v2519
        %v2521 = vrot.slane %v2519, 4
        %v2522 = vrot.slane %v2503, 5
        %v2523 = vrot.slane %v2522, 4
        %v2524 = vrot.slane %v2504, 5
        %v2525 = vsel %vm1971, %v2523, %v2524
        %v2526 = vrot.slane %v2524, 4
        %v2527 = vrot.slane %v2505, 5
        %v2528 = vrot.slane %v2527, 4
        %v2529 = vrot.slane %v2506, 5
        %v2530 = vsel %vm1971, %v2528, %v2529
        %v2531 = vrot.slane %v2529, 4
        %v2532 = vrot.slane %v2507, 5
        %v2533 = vrot.slane %v2532, 4
        %v2534 = vrot.slane %v2508, 5
        %v2535 = vsel %vm1971, %v2533, %v2534
        %v2536 = vrot.slane %v2534, 4
        %2537 = vrot.lane.b32.xlu0 %v2520, 126
        %v2538 = vpop.permute.xlu0 %2537
        %2539 = vrot.lane.b32.xlu0 %v2521, 126
        %v2540 = vpop.permute.xlu0 %2539
        %2541 = vrot.lane.b32.xlu0 %v2525, 126
        %v2542 = vpop.permute.xlu0 %2541
        %2543 = vrot.lane.b32.xlu0 %v2526, 126
        %v2544 = vpop.permute.xlu0 %2543
        %2545 = vrot.lane.b32.xlu0 %v2530, 126
        %v2546 = vpop.permute.xlu0 %2545
        %2547 = vrot.lane.b32.xlu0 %v2531, 126
        %v2548 = vpop.permute.xlu0 %2547
        %2549 = vrot.lane.b32.xlu0 %v2535, 126
        %v2550 = vpop.permute.xlu0 %2549
        %2551 = vrot.lane.b32.xlu0 %v2536, 126
        %v2552 = vpop.permute.xlu0 %2551
        %v2555 = vunpack.c.l.s4 1983009808
        %v2556 = vunpack.c.0.s8 %v2555
        %v2557 = vperm.slane %v2538, %v2556
        %v2560 = vunpack.c.l.s4 1983009808
        %v2561 = vunpack.c.0.s8 %v2560
        %v2562 = vperm.slane %v2546, %v2561
        %v2563 = vrot.slane %v2562, 4
        %v2564 = vsel %vm222, %v2563, %v2557
        %v2565 = vrot.slane %v2557, 4
        %v2566 = vsel %vm222, %v2562, %v2565
        %v2568 = vunpack.c.l.s4 1934713408
        %v2569 = vunpack.c.0.s8 %v2568
        %v2570 = vperm.slane %v2564, %v2569
        %v2572 = vunpack.c.l.s4 1934713408
        %v2573 = vunpack.c.0.s8 %v2572
        %v2574 = vperm.slane %v2566, %v2573
        %v2575 = vrot.slane %v2570, 4
        %v2576 = vsel %vm222, 0, %v2575
        %v2577 = vrot.slane %v2574, 4
        %v2578 = vsel %vm222, 0, %v2577
        %v2581 = vunpack.c.l.s4 1983009808
        %v2582 = vunpack.c.0.s8 %v2581
        %v2583 = vperm.slane %v2542, %v2582
        %v2586 = vunpack.c.l.s4 1983009808
        %v2587 = vunpack.c.0.s8 %v2586
        %v2588 = vperm.slane %v2550, %v2587
        %v2589 = vrot.slane %v2588, 4
        %v2590 = vsel %vm222, %v2589, %v2583
        %v2591 = vrot.slane %v2583, 4
        %v2592 = vsel %vm222, %v2588, %v2591
        %v2594 = vunpack.c.l.s4 1934713408
        %v2595 = vunpack.c.0.s8 %v2594
        %v2596 = vperm.slane %v2590, %v2595
        %v2598 = vunpack.c.l.s4 1934713408
        %v2599 = vunpack.c.0.s8 %v2598
        %v2600 = vperm.slane %v2592, %v2599
        %v2601 = vrot.slane %v2596, 4
        %v2602 = vsel %vm222, 0, %v2601
        %v2603 = vrot.slane %v2600, 4
        %v2604 = vsel %vm222, 0, %v2603
        %v2607 = vunpack.c.l.s4 1983009808
        %v2608 = vunpack.c.0.s8 %v2607
        %v2609 = vperm.slane %v2540, %v2608
        %v2612 = vunpack.c.l.s4 1983009808
        %v2613 = vunpack.c.0.s8 %v2612
        %v2614 = vperm.slane %v2548, %v2613
        %v2615 = vrot.slane %v2614, 4
        %v2616 = vsel %vm222, %v2615, %v2609
        %v2617 = vrot.slane %v2609, 4
        %v2618 = vsel %vm222, %v2614, %v2617
        %v2620 = vunpack.c.l.s4 1934713408
        %v2621 = vunpack.c.0.s8 %v2620
        %v2622 = vperm.slane %v2616, %v2621
        %v2623 = vrot.slane %v2622, 4
        %v2624 = vsel %vm222, 0, %v2623
        %v2626 = vunpack.c.l.s4 1934713408
        %v2627 = vunpack.c.0.s8 %v2626
        %v2628 = vperm.slane %v2618, %v2627
        %v2631 = vunpack.c.l.s4 1983009808
        %v2632 = vunpack.c.0.s8 %v2631
        %v2633 = vperm.slane %v2544, %v2632
        %v2636 = vunpack.c.l.s4 1983009808
        %v2637 = vunpack.c.0.s8 %v2636
        %v2638 = vperm.slane %v2552, %v2637
        %v2639 = vrot.slane %v2638, 4
        %v2640 = vsel %vm222, %v2639, %v2633
        %v2641 = vrot.slane %v2633, 4
        %v2642 = vsel %vm222, %v2638, %v2641
        %v2644 = vunpack.c.l.s4 1934713408
        %v2645 = vunpack.c.0.s8 %v2644
        %v2646 = vperm.slane %v2640, %v2645
        %v2647 = vrot.slane %v2646, 4
        %v2648 = vsel %vm222, 0, %v2647
        %v2650 = vunpack.c.l.s4 1934713408
        %v2651 = vunpack.c.0.s8 %v2650
        %v2652 = vperm.slane %v2642, %v2651
        %v2655 = vpack.i.b16 %v2596, %v2570
        %v2656 = vshrl.u32 %v2570, 16
        %v2657 = vshrl.u32 %v2596, 16
        %v2658 = vpack.i.b16 %v2657, %v2656
        %v2661 = vpack.i.b16 %v2602, %v2576
        %v2662 = vshrl.u32 %v2576, 16
        %v2663 = vshrl.u32 %v2602, 16
        %v2664 = vpack.i.b16 %v2663, %v2662
        %v2667 = vpack.i.b16 %v2600, %v2574
        %v2668 = vshrl.u32 %v2574, 16
        %v2669 = vshrl.u32 %v2600, 16
        %v2670 = vpack.i.b16 %v2669, %v2668
        %v2673 = vpack.i.b16 %v2604, %v2578
        %v2674 = vshrl.u32 %v2578, 16
        %v2675 = vshrl.u32 %v2604, 16
        %v2676 = vpack.i.b16 %v2675, %v2674
        %v2679 = vpack.i.b16 %v2646, %v2622
        %v2680 = vshrl.u32 %v2622, 16
        %v2681 = vshrl.u32 %v2646, 16
        %v2682 = vpack.i.b16 %v2681, %v2680
        %v2685 = vpack.i.b16 %v2648, %v2624
        %v2686 = vshrl.u32 %v2624, 16
        %v2687 = vshrl.u32 %v2648, 16
        %v2688 = vpack.i.b16 %v2687, %v2686
        %v2691 = vpack.i.b16 %v2652, %v2628
        %v2692 = vshrl.u32 %v2628, 16
        %v2693 = vshrl.u32 %v2652, 16
        %v2694 = vpack.i.b16 %v2693, %v2692
        %v2695 = vunpack.c.l.b16 %v2658
        %v2696 = vpack.c.b16 %v2695, %v2695
        %2697 = vrot.lane.b32.xlu0 %v2696, 14
        %v2698 = vpop.permute.xlu0 %2697
        %v2699 = vunpack.c.l.b16 %v2661
        %v2700 = vpack.c.b16 %v2699, %v2699
        %2701 = vrot.lane.b32.xlu0 %v2700, 28
        %v2702 = vpop.permute.xlu0 %2701
        %v2703 = vunpack.c.l.b16 %v2664
        %v2704 = vpack.c.b16 %v2703, %v2703
        %2705 = vrot.lane.b32.xlu0 %v2704, 42
        %v2706 = vpop.permute.xlu0 %2705
        %v2707 = vunpack.c.l.b16 %v2667
        %v2708 = vpack.c.b16 %v2707, %v2707
        %2709 = vrot.lane.b32.xlu0 %v2708, 56
        %v2710 = vpop.permute.xlu0 %2709
        %v2711 = vunpack.c.l.b16 %v2670
        %v2712 = vpack.c.b16 %v2711, %v2711
        %2713 = vrot.lane.b32.xlu0 %v2712, 70
        %v2714 = vpop.permute.xlu0 %2713
        %v2715 = vunpack.c.l.b16 %v2673
        %v2716 = vpack.c.b16 %v2715, %v2715
        %2717 = vrot.lane.b32.xlu0 %v2716, 84
        %v2718 = vpop.permute.xlu0 %2717
        %v2719 = vunpack.c.l.b16 %v2676
        %v2720 = vpack.c.b16 %v2719, %v2719
        %2721 = vrot.lane.b32.xlu0 %v2720, 98
        %v2722 = vpop.permute.xlu0 %2721
        %v2723 = vunpack.c.l.b16 %v2679
        %v2724 = vpack.c.b16 %v2723, %v2723
        %2725 = vrot.lane.b32.xlu0 %v2724, 112
        %v2726 = vpop.permute.xlu0 %2725
        %v2727 = vunpack.c.l.b16 %v2682
        %v2728 = vpack.c.b16 %v2727, %v2727
        %2729 = vrot.lane.b32.xlu0 %v2728, 126
        %v2730 = vpop.permute.xlu0 %2729
        %v2731 = vunpack.c.l.b16 %v2685
        %v2732 = vpack.c.b16 %v2731, %v2731
        %2733 = vrot.lane.b32.xlu0 %v2732, 12
        %v2734 = vpop.permute.xlu0 %2733
        %v2735 = vunpack.c.l.b16 %v2688
        %v2736 = vpack.c.b16 %v2735, %v2735
        %2737 = vrot.lane.b32.xlu0 %v2736, 26
        %v2738 = vpop.permute.xlu0 %2737
        %v2739 = vunpack.c.l.b16 %v2691
        %v2740 = vpack.c.b16 %v2739, %v2739
        %2741 = vrot.lane.b32.xlu0 %v2740, 40
        %v2742 = vpop.permute.xlu0 %2741
        %v2743 = vunpack.c.l.b16 %v2694
        %v2744 = vpack.c.b16 %v2743, %v2743
        %2745 = vrot.lane.b32.xlu0 %v2744, 54
        %v2746 = vpop.permute.xlu0 %2745
        %v2749 = vsel %vm406, %v2655, %v2698
        %v2751 = vsel %vm410, %v2749, %v2702
        %v2753 = vsel %vm413, %v2751, %v2706
        %v2755 = vsel %vm416, %v2753, %v2710
        %v2757 = vsel %vm419, %v2755, %v2714
        %v2759 = vsel %vm422, %v2757, %v2718
        %v2761 = vsel %vm425, %v2759, %v2722
        %v2763 = vsel %vm428, %v2761, %v2726
        %v2765 = vsel %vm431, %v2763, %v2730
        %v2767 = vsel %vm434, %v2730, %v2734
        %v2769 = vsel %vm437, %v2767, %v2738
        %v2771 = vsel %vm440, %v2769, %v2742
        %v2773 = vsel %vm443, %v2771, %v2746
        %v2776 = vunpack.c.l.b16 %v2765
        %v2777 = vunpack.c.l.b16 %v2773
        %v2778 = vpack.c.b16 %v2777, %v2776
        %2780 = vst.msk [vmem:[#allocation3 + $0x20] sm:$0x33] %vm454, %v2778
        %v2781 = vld [vmem:[#allocation3] sm:$0xff]
        %v2782 = vld [vmem:[#allocation3 + $0x8] sm:$0xff]
        %v2783 = vld [vmem:[#allocation3 + $0x10] sm:$0xff]
        %v2784 = vld [vmem:[#allocation3 + $0x18] sm:$0xff]
        %v2785 = vld [vmem:[#allocation3 + $0x20] sm:$0xff]
        %v2786 = vld [vmem:[#allocation3 + $0x28] sm:$0xff]
        %v2789 = vunpack.c.l.b16 %v184
        %v2790 = vunpack.c.l.b16 %v185
        %v2791 = vpack.c.b16 %v2790, %v2789
        %v2798 = vunpack.c.l.b16 %v2781
        %v2799 = vunpack.c.h.b16 %v2781
        %v2800 = vunpack.c.l.b16 %v2782
        %v2801 = vunpack.c.h.b16 %v2782
        %v2802 = vunpack.c.l.b16 %v2783
        %v2803 = vunpack.c.h.b16 %v2783
        %v2804 = vunpack.c.l.b16 %v2784
        %v2805 = vunpack.c.h.b16 %v2784
        %v2806 = vunpack.c.l.b16 %v2785
        %v2807 = vunpack.c.h.b16 %v2785
        %v2808 = vunpack.c.l.b16 %v2786
        %v2809 = vunpack.c.h.b16 %v2786
        %v2810 = vpack.c.b16 %v2800, %v2798
        %v2811 = vpack.c.b16 %v2801, %v2799
        %v2812 = vpack.c.b16 %v2804, %v2802
        %v2813 = vpack.c.b16 %v2805, %v2803
        %v2814 = vpack.c.b16 %v2808, %v2806
        %v2815 = vpack.c.b16 %v2809, %v2807
        %vm2822 = vcmask 392192
        %v2824 = vsel %vm2822, %v2791, 0
        %2826 = vmatpush.bf16.msra.mxu0 0
        %2827 = vmatpush.bf16.msra.mxu0 0
        %2828 = vmatpush.bf16.msra.mxu0 0
        %2829 = vmatpush.bf16.msra.mxu0 0
        %2830 = vmatpush.bf16.msra.mxu0 0
        %2831 = vmatpush.bf16.msra.mxu0 %v2814
        %2832 = vmatpush.bf16.msra.mxu0 %v2812
        %2833 = vmatpush.bf16.msra.mxu0 %v2810
        %2834 = vmatmul.bf16.gmra.mxu0 %v2824
        %v2835 = vpop.f32.mrf.mxu0
        %v2836 = vadd.f32 0.0, %v2835
        %v2837 = vpop.f32.mrf.mxu0
        %v2838 = vadd.f32 0.0, %v2837
        %2839 = vdwg.mxu0
        %2840 = vmatpush.bf16.msra.mxu0 0
        %2841 = vmatpush.bf16.msra.mxu0 0
        %2842 = vmatpush.bf16.msra.mxu0 0
        %2843 = vmatpush.bf16.msra.mxu0 0
        %2844 = vmatpush.bf16.msra.mxu0 0
        %2845 = vmatpush.bf16.msra.mxu0 %v2815
        %2846 = vmatpush.bf16.msra.mxu0 %v2813
        %2847 = vmatpush.bf16.msra.mxu0 %v2811
        %2848 = vmatmul.bf16.gmra.mxu0 %v2824
        %v2849 = vpop.f32.mrf.mxu0
        %v2850 = vadd.f32 0.0, %v2849
        %v2851 = vpop.f32.mrf.mxu0
        %v2852 = vadd.f32 0.0, %v2851
        %2853 = vdwg.mxu0
        %2854 = vst [vmem:[%s180] sm:$0xff] %v2836
        %2855 = vst [vmem:[%s180 + $0x8] sm:$0xff] %v2850
        %2856 = vst [vmem:[%s180 + $0x10] sm:$0xff] %v2838
        %2857 = vst [vmem:[%s180 + $0x18] sm:$0xff] %v2852
        %s2858 = sand.u32 %s75, 1
        %s2859 = scalar_lea.sflag [#allocation6], %s2858
        %s2860 = sand.u32 %s75, 1
        %s2861 = smul.addr %s2860, 32
        %s2862 = scalar_lea.vmem [#allocation9], %s2861
        // Predicated region
        $region37: #{tpu_custom_call.1} parent=27 // pred_check
          %p2863 = pneg %p85
        $region38: #{tpu_custom_call.1} parent=27 // pred_check_branch
          %2865 = sbr.rel (%p2863) target = $region40
        $region39: #{tpu_custom_call.1} parent=27 // pred_region
          %2867 = vsyncadd %s2859, 0
          %s2868 = smul.addr %s20, 4
          %s2869 = smul.addr %s2868, 8
          %s2870 = scalar_lea.hbm %s2, %s2869
          %s2871 = sshll.u32 %s2862, 4
          %s2872 = int_to_ptr.vmem [resolvable:$true] %s2871
          %s2873 = sshll.u32 %s2870, 4
          %s2874 = int_to_ptr.hbm [resolvable:$true] %s2873
          %2879 = dma.vmem_to_hbm [thread:$0]  %s2872, 512, %s2874, %s2859, 256, 256, 16
        $region40: #{tpu_custom_call.1} parent=27 // pred_fallthru
          _
      $region28: #{tpu_custom_call.1} parent=5 // pred_fallthru
        _
      %p2880 = scmp.le.s32.totalorder 2, %s15
      // Predicated region
      $region41: #{tpu_custom_call.1} parent=5 // pred_check
        %p2881 = pneg %p2880
      $region42: #{tpu_custom_call.1} parent=5 // pred_check_branch
        %2883 = sbr.rel (%p2881) target = $region44
      $region43: #{tpu_custom_call.1} parent=5 // pred_region
        %s2884 = ssub.s32 %s15, 2
        // Predicated region
        $region45: #{tpu_custom_call.1} parent=43 // pred_check
          %p2885 = pneg %p91
        $region46: #{tpu_custom_call.1} parent=43 // pred_check_branch
          %2887 = sbr.rel (%p2885) target = $region48
        $region47: #{tpu_custom_call.1} parent=43 // pred_region
          %s2888 = sand.u32 %s76, 1
          %s2889 = scalar_lea.sflag [#allocation6], %s2888
          %s2890 = sand.u32 %s76, 1
          %s2891 = smul.addr %s2890, 32
          %s2892 = scalar_lea.vmem [#allocation9], %s2891
          %2894 = dma.done %s2889, 512
        $region48: #{tpu_custom_call.1} parent=43 // pred_fallthru
          _
      $region44: #{tpu_custom_call.1} parent=5 // pred_fallthru
        _
    $region6: #{tpu_custom_call.1} parent=1 // loop_footer
      %s19 = sadd.s32 1, %s15
    $region7: #{tpu_custom_call.1} parent=1 // loop_footer_branch
      %14 = sbr.rel target = $region3
    $region8: #{tpu_custom_call.1} parent=1 // loop_exit
      _
    %2895 = vsyncpa [#allocation5], 1
    %s2896 = scalar_lea.sflag [#allocation5], 1
    %2897 = vsyncpa %s2896, 1
    %2898 = vsyncpa [#allocation8], 1
    %2899 = vsyncpa [#allocation6], 1
    %s2900 = scalar_lea.sflag [#allocation6], 1
    %2901 = vsyncpa %s2900, 1

</llo_original>
